<compile_context>
chip_gen: v5e
topology: v5e:2x2
jax: 0.10.0
libtpu: 0.0.40
codegen_flags: <defaults>
</compile_context>

<pallas_src>
import functools
import math

import jax
import jax.numpy as jnp
from jax.experimental import pallas as pl
from jax.experimental.pallas import tpu as pltpu

BN_EPS = 1e-5


def _rup(x, m):
    return ((x + m - 1) // m) * m


def _apply_act(y, act):
    if act == 'relu':
        return jnp.maximum(y, 0.0)
    if act == 'hswish':                      # x * relu6(x + 3) / 6
        return y * jnp.clip(y + 3.0, 0.0, 6.0) * (1.0 / 6.0)
    if act == 'hsig':                        # relu6(x + 3) / 6
        return jnp.clip(y + 3.0, 0.0, 6.0) * (1.0 / 6.0)
    return y


def _fold_bn(bn):
    scale = bn['gamma'] / jnp.sqrt(bn['var'] + BN_EPS)
    bias = bn['beta'] - bn['mean'] * scale
    return scale, bias


# ---------------------------------------------------------------------------
# Parameter preparation (runs ONCE, outside jit): fold BN, pad, cast to bf16
# ---------------------------------------------------------------------------

def prepare_mobile_bottleneck(raw, inp, oup, kernel, stride, exp, se, nl):
    cexp_p = _rup(exp, 128)

    s1, b1 = _fold_bn(raw['bn1'])
    w1 = raw['pw1_w'].reshape(exp, inp).T * s1[None, :]               # (inp, exp)
    s2, b2 = _fold_bn(raw['bn2'])
    wdw = raw['dw_w'].reshape(exp, kernel * kernel).T * s2[None, :]   # (k*k, exp)
    s3, b3 = _fold_bn(raw['bn3'])
    w2 = raw['pw2_w'].reshape(oup, exp).T * s3[None, :]               # (exp, oup)

    # NOTE: the padded expansion lanes of w1/b1/wdw/b2 (and se_w2) MUST remain
    # exactly zero so that padded channels stay 0 before/after the SE hsigmoid
    # gate; any future non-zero padding would leak gate*0.5 into real outputs.
    prepared = {
        # pw1 weight keeps the TRUE input-channel contraction dim (no 128 pad).
        'w1': jnp.zeros((inp, cexp_p), jnp.float32).at[:, :exp].set(w1)
                 .astype(jnp.bfloat16),
        'b1': jnp.zeros((1, cexp_p), jnp.float32).at[0, :exp].set(b1),
        'wdw': jnp.zeros((kernel * kernel, cexp_p), jnp.float32).at[:, :exp].set(wdw),
        'b2': jnp.zeros((1, cexp_p), jnp.float32).at[0, :exp].set(b2),
        # pw2 weight keeps the TRUE output width (lane-narrow, but f32-exact).
        'w2': jnp.zeros((cexp_p, oup), jnp.float32).at[:exp, :].set(w2)
                 .astype(jnp.bfloat16),
        'b3': b3.reshape(1, oup).astype(jnp.float32),
    }
    if se:
        cr = exp // 4
        cr_p = _rup(cr, 128)
        prepared['se_w1'] = (jnp.zeros((cexp_p, cr_p), jnp.float32)
                             .at[:exp, :cr].set(raw['se_w1'].T))
        prepared['se_w2'] = (jnp.zeros((cr_p, cexp_p), jnp.float32)
                             .at[:cr, :exp].set(raw['se_w2'].T))

    cfg = dict(inp=inp, oup=oup, exp=exp, k=kernel, stride=stride,
               pad=(kernel - 1) // 2, se=se,
               act='relu' if nl == 'RE' else 'hswish',
               cexp_p=cexp_p)
    return prepared, cfg


# ---------------------------------------------------------------------------
# Fused forward: thin JAX layout glue + ONE pallas_call
# ---------------------------------------------------------------------------

def mobile_bottleneck_forward(prepared, x, *, cfg):
    N, Cin, H, W = x.shape
    k, s, p = cfg['k'], cfg['stride'], cfg['pad']
    oup, cexp_p = cfg['oup'], cfg['cexp_p']
    se, act = cfg['se'], cfg['act']
    use_res = (s == 1 and Cin == oup)

    Hp, Wp = H + 2 * p, W + 2 * p
    OH = (Hp - k) // s + 1
    OW = (Wp - k) // s + 1
    Hps, Wps = -(-Hp // s), -(-Wp // s)          # ceil(Hp/s), ceil(Wp/s)
    Mo = OH * OW
    Mo_pad = max(8, _rup(Mo, 8))
    n_phase = s * s

    x_nhwc = jnp.transpose(x, (0, 2, 3, 1))      # (N, H, W, Cin)

    # Stride-phase decomposition of the input: positions regrouped so that every
    # depthwise tap read (and every pw1 interior store) is a contiguous *static*
    # slice of the padded VMEM buffer.  All phases are concatenated along the
    # row axis so the kernel runs a SINGLE pw1 matmul over H*W rows.
    phase_geo, row_off, blocks = [], [], []
    off = 0
    for a in range(s):
        h0 = (a - p) % s
        for b in range(s):
            w0 = (b - p) % s
            xab = x_nhwc[:, h0::s, w0::s, :]
            Hab, Wab = xab.shape[1], xab.shape[2]
            blocks.append(xab.reshape(N, Hab * Wab, Cin))
            phase_geo.append((Hab, Wab, (p + h0) // s, (p + w0) // s))
            row_off.append(off)
            off += Hab * Wab
    rows = off                                   # == H * W
    rows_pad = max(16, _rup(rows, 16))           # bf16 sublane-friendly
    x_cat = blocks[0] if n_phase == 1 else jnp.concatenate(blocks, axis=1)
    if rows_pad > rows:
        x_cat = jnp.pad(x_cat, ((0, 0), (0, rows_pad - rows), (0, 0)))
    x_cat = x_cat.astype(jnp.bfloat16)           # bf16, TRUE channel count

    if use_res:
        x_res = x_nhwc.reshape(N, H * W, Cin).astype(jnp.float32)   # unpadded ch
        if Mo_pad > H * W:
            x_res = jnp.pad(x_res, ((0, 0), (0, Mo_pad - H * W), (0, 0)))

    def kernel(*refs):
        i = 0
        x_ref = refs[i]; i += 1
        w1_ref, b1_ref, wdw_ref, b2_ref = refs[i:i + 4]; i += 4
        if se:
            sw1_ref, sw2_ref = refs[i:i + 2]; i += 2
        w2_ref, b3_ref = refs[i:i + 2]; i += 2
        if use_res:
            xres_ref = refs[i]; i += 1
        o_ref = refs[i]; i += 1
        pad_ref, dw_ref = refs[i:i + 2]

        # --- halo-only zeroing of the padded depthwise buffer (per grid step,
        #     megacore-safe); the interior is fully overwritten by pw1 below.
        for ph in range(n_phase):
            Hab, Wab, r0, c0 = phase_geo[ph]
            if r0 > 0:
                pad_ref[ph, 0:r0, :, :] = jnp.zeros((r0, Wps, cexp_p), jnp.float32)
            if r0 + Hab < Hps:
                pad_ref[ph, r0 + Hab:Hps, :, :] = jnp.zeros(
                    (Hps - r0 - Hab, Wps, cexp_p), jnp.float32)
            if c0 > 0:
                pad_ref[ph, r0:r0 + Hab, 0:c0, :] = jnp.zeros(
                    (Hab, c0, cexp_p), jnp.float32)
            if c0 + Wab < Wps:
                pad_ref[ph, r0:r0 + Hab, c0 + Wab:Wps, :] = jnp.zeros(
                    (Hab, Wps - c0 - Wab, cexp_p), jnp.float32)

        # --- 1x1 expansion conv + BN1 + nonlinearity: ONE MXU matmul ----------
        y = jnp.dot(x_ref[0], w1_ref[...], preferred_element_type=jnp.float32)
        y = _apply_act(y + b1_ref[...], act)
        for ph in range(n_phase):
            Hab, Wab, r0, c0 = phase_geo[ph]
            o0 = row_off[ph]
            pad_ref[ph, r0:r0 + Hab, c0:c0 + Wab, :] = (
                y[o0:o0 + Hab * Wab, :].reshape(Hab, Wab, cexp_p))

        # --- depthwise k x k conv + BN2 bias (VPU tap accumulation, f32) ------
        acc = None
        for ti in range(k):
            for tj in range(k):
                ph = (ti % s) * s + (tj % s)
                tap = pad_ref[ph, ti // s:ti // s + OH, tj // s:tj // s + OW, :]
                term = tap * wdw_ref[ti * k + tj]
                acc = term if acc is None else acc + term
        acc = acc + b2_ref[0]

        # Stream the accumulator through VMEM so the (OH,OW,cexp) f32 value is
        # not live across the SE matmuls (vreg spill pressure).
        if Mo_pad > Mo:
            dw_ref[Mo:, :] = jnp.zeros((Mo_pad - Mo, cexp_p), jnp.float32)
        dw_ref[0:Mo, :] = acc.reshape(Mo, cexp_p)

        # --- squeeze-excite: avg-pool (VPU/XLU) + tiny FCs; gate fused into the
        #     pw2 LHS read together with the nonlinearity ------------------------
        lhs = dw_ref[...]
        if se:
            pooled = jnp.sum(dw_ref[0:Mo, :], axis=0) * (1.0 / Mo)
            pooled = jnp.broadcast_to(pooled.reshape(1, cexp_p), (8, cexp_p))
            hid = jnp.maximum(
                jnp.dot(pooled, sw1_ref[...], preferred_element_type=jnp.float32),
                0.0)
            gate = jnp.dot(hid, sw2_ref[...], preferred_element_type=jnp.float32)
            gate = jnp.clip(gate + 3.0, 0.0, 6.0) * (1.0 / 6.0)
            lhs = lhs * gate[0]
        lhs = _apply_act(lhs, act).astype(jnp.bfloat16)

        # --- 1x1 projection conv + BN3 (+ fused residual add) -----------------
        y2 = jnp.dot(lhs, w2_ref[...], preferred_element_type=jnp.float32)
        y2 = y2 + b3_ref[...]
        if use_res:
            y2 = y2 + xres_ref[0]
        o_ref[0] = y2.astype(o_ref.dtype)

    def _const_spec(arr):
        zeros = (0,) * arr.ndim
        return pl.BlockSpec(arr.shape, lambda n, _z=zeros: _z)

    operands = [x_cat]
    in_specs = [pl.BlockSpec((1, rows_pad, Cin), lambda n: (n, 0, 0))]
    for name in ('w1', 'b1', 'wdw', 'b2'):
        operands.append(prepared[name])
        in_specs.append(_const_spec(prepared[name]))
    if se:
        for name in ('se_w1', 'se_w2'):
            operands.append(prepared[name])
            in_specs.append(_const_spec(prepared[name]))
    for name in ('w2', 'b3'):
        operands.append(prepared[name])
        in_specs.append(_const_spec(prepared[name]))
    if use_res:
        operands.append(x_res)
        in_specs.append(pl.BlockSpec((1, Mo_pad, Cin), lambda n: (n, 0, 0)))

    out = pl.pallas_call(
        kernel,
        out_shape=jax.ShapeDtypeStruct((N, Mo_pad, oup), jnp.float32),
        grid_spec=pltpu.PrefetchScalarGridSpec(
            num_scalar_prefetch=0,
            grid=(N,),
            in_specs=in_specs,
            out_specs=pl.BlockSpec((1, Mo_pad, oup), lambda n: (n, 0, 0)),
            scratch_shapes=[
                pltpu.VMEM((n_phase, Hps, Wps, cexp_p), jnp.float32),
                pltpu.VMEM((Mo_pad, cexp_p), jnp.float32),
            ]),
        compiler_params=pltpu.CompilerParams(
            dimension_semantics=("parallel",)),
    )(*operands)

    y = out[:, :Mo, :].reshape(N, OH, OW, oup)
    return jnp.transpose(y, (0, 3, 1, 2))


# ---------------------------------------------------------------------------
# Pure-JAX reference (independent BN fold, same bf16 quantization points)
# ---------------------------------------------------------------------------

def mobile_bottleneck_reference(raw, x, *, cfg):
    N, Cin, H, W = x.shape
    k, s, p = cfg['k'], cfg['stride'], cfg['pad']
    exp, oup = cfg['exp'], cfg['oup']
    se, act = cfg['se'], cfg['act']
    use_res = (s == 1 and Cin == oup)

    def q(w):
        return w.astype(jnp.bfloat16).astype(jnp.float32)

    s1, b1 = _fold_bn(raw['bn1'])
    s2, b2 = _fold_bn(raw['bn2'])
    s3, b3 = _fold_bn(raw['bn3'])
    w1 = q(raw['pw1_w'].reshape(exp, Cin) * s1[:, None])          # (exp, cin)
    wdw = raw['dw_w'][:, 0] * s2[:, None, None]                   # (exp, k, k)
    w2 = q(raw['pw2_w'].reshape(oup, exp) * s3[:, None])          # (oup, exp)

    xn = jnp.transpose(x, (0, 2, 3, 1)).astype(jnp.float32)
    y1 = jnp.einsum('nhwc,ec->nhwe', q(xn), w1) + b1
    y1 = _apply_act(y1, act)

    y1p = jnp.pad(y1, ((0, 0), (p, p), (p, p), (0, 0)))
    OH = (H + 2 * p - k) // s + 1
    OW = (W + 2 * p - k) // s + 1
    acc = jnp.zeros((N, OH, OW, exp), jnp.float32)
    for ti in range(k):
        for tj in range(k):
            tap = y1p[:, ti:ti + (OH - 1) * s + 1:s, tj:tj + (OW - 1) * s + 1:s, :]
            acc = acc + tap * wdw[:, ti, tj]
    acc = acc + b2

    if se:
        pooled = jnp.mean(acc, axis=(1, 2))                       # (N, exp)
        hid = jnp.maximum(pooled @ raw['se_w1'].T, 0.0)
        gate = jnp.clip(hid @ raw['se_w2'].T + 3.0, 0.0, 6.0) * (1.0 / 6.0)
        acc = acc * gate[:, None, None, :]
    acc = _apply_act(acc, act)

    y2 = jnp.einsum('nhwe,oe->nhwo', q(acc), w2) + b3
    out = jnp.transpose(y2, (0, 3, 1, 2))
    if use_res:
        out = out + x
    return out


# ---------------------------------------------------------------------------
# Deterministic parameter init (matching the PyTorch module's parameter shapes)
# ---------------------------------------------------------------------------

def init_params(key, inp, oup, kernel, exp, se):
    keys = jax.random.split(key, 8)

    def conv_w(k_, cout, cin, kh, kw):
        std = math.sqrt(2.0 / (cout * kh * kw))    # kaiming_normal_(mode='fan_out')
        return std * jax.random.normal(k_, (cout, cin, kh, kw), jnp.float32)

    def bn_p(k_, c):
        k1, k2, k3, k4 = jax.random.split(k_, 4)
        return dict(gamma=1.0 + 0.1 * jax.random.normal(k1, (c,), jnp.float32),
                    beta=0.1 * jax.random.normal(k2, (c,), jnp.float32),
                    mean=0.1 * jax.random.normal(k3, (c,), jnp.float32),
                    var=jax.random.uniform(k4, (c,), jnp.float32, 0.5, 1.5))

    raw = {
        'pw1_w': conv_w(keys[0], exp, inp, 1, 1),
        'bn1': bn_p(keys[1], exp),
        'dw_w': conv_w(keys[2], exp, 1, kernel, kernel),
        'bn2': bn_p(keys[3], exp),
        'pw2_w': conv_w(keys[4], oup, exp, 1, 1),
        'bn3': bn_p(keys[5], oup),
    }
    if se:
        cr = exp // 4
        raw['se_w1'] = 0.1 * jax.random.normal(keys[6], (cr, exp), jnp.float32)
        raw['se_w2'] = 0.1 * jax.random.normal(keys[7], (exp, cr), jnp.float32)
    return raw


# ---------------------------------------------------------------------------
# Main
# ---------------------------------------------------------------------------

if __name__ == "__main__":
    key = jax.random.PRNGKey(0)
    configs = [
        # representative MobileNetV3 blocks: (inp, oup, kernel, stride, exp, se, nl)
        dict(inp=16, oup=40, kernel=5, stride=2, exp=64, se=True, nl='HS'),
        dict(inp=16, oup=16, kernel=3, stride=1, exp=64, se=False, nl='RE'),
        dict(inp=16, oup=16, kernel=3, stride=1, exp=72, se=True, nl='HS'),
    ]
    N, H, W = 2, 16, 16

    for idx, c in enumerate(configs):
        key, pkey, xkey = jax.random.split(key, 3)
        raw = init_params(pkey, c['inp'], c['oup'], c['kernel'], c['exp'], c['se'])
        prepared, cfg = prepare_mobile_bottleneck(
            raw, c['inp'], c['oup'], c['kernel'], c['stride'], c['exp'],
            c['se'], c['nl'])
        x = jax.random.normal(xkey, (N, c['inp'], H, W), jnp.float32)

        fwd = jax.jit(functools.partial(mobile_bottleneck_forward, cfg=cfg))
        out = jax.block_until_ready(fwd(prepared, x))

        OH = (H + 2 * cfg['pad'] - c['kernel']) // c['stride'] + 1
        OW = (W + 2 * cfg['pad'] - c['kernel']) // c['stride'] + 1
        assert out.shape == (N, c['oup'], OH, OW), (idx, out.shape)
        assert bool(jnp.all(jnp.isfinite(out))), idx

        ref = mobile_bottleneck_reference(raw, x, cfg=cfg)
        err = float(jnp.max(jnp.abs(out - ref)))
        assert err < 1e-2, (idx, err)

    print("KERNEL_OK")
</pallas_src>

<mosaic_0001>
module attributes {stable_mosaic.version = 11 : i64} {
  func.func @kernel(%arg0: i32, %arg1: memref<1x256x16xbf16, #tpu.memory_space<vmem>>, %arg2: memref<16x128xbf16, #tpu.memory_space<vmem>>, %arg3: memref<1x128xf32, #tpu.memory_space<vmem>>, %arg4: memref<25x128xf32, #tpu.memory_space<vmem>>, %arg5: memref<1x128xf32, #tpu.memory_space<vmem>>, %arg6: memref<128x128xf32, #tpu.memory_space<vmem>>, %arg7: memref<128x128xf32, #tpu.memory_space<vmem>>, %arg8: memref<128x40xbf16, #tpu.memory_space<vmem>>, %arg9: memref<1x40xf32, #tpu.memory_space<vmem>>, %arg10: memref<1x64x40xf32, #tpu.memory_space<vmem>>, %arg11: memref<4x10x10x128xf32, #tpu.memory_space<vmem>>, %arg12: memref<64x128xf32, #tpu.memory_space<vmem>>) attributes {dimension_semantics = [#tpu.dimension_semantics<parallel>], iteration_bounds = array<i64: 2>, scalar_prefetch = 0 : i64, scratch_operands = 2 : i64, tpu.core_type = #tpu.core_type<tc>, window_params = [{transform_indices = @transform_0, window_bounds = array<i64: 1, 256, 16>}, {pipeline_mode = #tpu.pipeline_mode<synchronous>, transform_indices = @transform_1, window_bounds = array<i64: 16, 128>}, {pipeline_mode = #tpu.pipeline_mode<synchronous>, transform_indices = @transform_2, window_bounds = array<i64: 1, 128>}, {pipeline_mode = #tpu.pipeline_mode<synchronous>, transform_indices = @transform_3, window_bounds = array<i64: 25, 128>}, {pipeline_mode = #tpu.pipeline_mode<synchronous>, transform_indices = @transform_4, window_bounds = array<i64: 1, 128>}, {pipeline_mode = #tpu.pipeline_mode<synchronous>, transform_indices = @transform_5, window_bounds = array<i64: 128, 128>}, {pipeline_mode = #tpu.pipeline_mode<synchronous>, transform_indices = @transform_6, window_bounds = array<i64: 128, 128>}, {pipeline_mode = #tpu.pipeline_mode<synchronous>, transform_indices = @transform_7, window_bounds = array<i64: 128, 40>}, {pipeline_mode = #tpu.pipeline_mode<synchronous>, transform_indices = @transform_8, window_bounds = array<i64: 1, 40>}, {transform_indices = @transform_9, window_bounds = array<i64: 1, 64, 40>}]} {
    %cst = arith.constant 0.000000e+00 : f32
    %0 = vector.broadcast %cst : f32 to vector<1x10x128xf32>
    %c0 = arith.constant 0 : index
    %c0_0 = arith.constant 0 : index
    %c0_1 = arith.constant 0 : index
    %c0_2 = arith.constant 0 : index
    %1 = vector.load %arg11[%c0, %c0_0, %c0_1, %c0_2] : memref<4x10x10x128xf32, #tpu.memory_space<vmem>>, vector<1x1x10x128xf32>
    %2 = vector.shape_cast %1 : vector<1x1x10x128xf32> to vector<1x10x128xf32>
    %3 = vector.shape_cast %0 : vector<1x10x128xf32> to vector<1x1x10x128xf32>
    tpu.vector_store %arg11[%c0, %c0_0, %c0_1, %c0_2], %3 {strides = array<i32>} : memref<4x10x10x128xf32, #tpu.memory_space<vmem>>, vector<1x1x10x128xf32>,
    %cst_3 = arith.constant 0.000000e+00 : f32
    %4 = vector.broadcast %cst_3 : f32 to vector<1x10x128xf32>
    %c0_4 = arith.constant 0 : index
    %c9 = arith.constant 9 : index
    %c0_5 = arith.constant 0 : index
    %c0_6 = arith.constant 0 : index
    %5 = vector.load %arg11[%c0_4, %c9, %c0_5, %c0_6] : memref<4x10x10x128xf32, #tpu.memory_space<vmem>>, vector<1x1x10x128xf32>
    %6 = vector.shape_cast %5 : vector<1x1x10x128xf32> to vector<1x10x128xf32>
    %7 = vector.shape_cast %4 : vector<1x10x128xf32> to vector<1x1x10x128xf32>
    tpu.vector_store %arg11[%c0_4, %c9, %c0_5, %c0_6], %7 {strides = array<i32>} : memref<4x10x10x128xf32, #tpu.memory_space<vmem>>, vector<1x1x10x128xf32>,
    %cst_7 = arith.constant 0.000000e+00 : f32
    %8 = vector.broadcast %cst_7 : f32 to vector<8x1x128xf32>
    %c0_8 = arith.constant 0 : index
    %c1 = arith.constant 1 : index
    %c0_9 = arith.constant 0 : index
    %c0_10 = arith.constant 0 : index
    %9 = vector.load %arg11[%c0_8, %c1, %c0_9, %c0_10] : memref<4x10x10x128xf32, #tpu.memory_space<vmem>>, vector<1x8x1x128xf32>
    %10 = vector.shape_cast %9 : vector<1x8x1x128xf32> to vector<8x1x128xf32>
    %11 = vector.shape_cast %8 : vector<8x1x128xf32> to vector<1x8x1x128xf32>
    tpu.vector_store %arg11[%c0_8, %c1, %c0_9, %c0_10], %11 {strides = array<i32>} : memref<4x10x10x128xf32, #tpu.memory_space<vmem>>, vector<1x8x1x128xf32>,
    %cst_11 = arith.constant 0.000000e+00 : f32
    %12 = vector.broadcast %cst_11 : f32 to vector<8x1x128xf32>
    %c0_12 = arith.constant 0 : index
    %c1_13 = arith.constant 1 : index
    %c9_14 = arith.constant 9 : index
    %c0_15 = arith.constant 0 : index
    %13 = vector.load %arg11[%c0_12, %c1_13, %c9_14, %c0_15] : memref<4x10x10x128xf32, #tpu.memory_space<vmem>>, vector<1x8x1x128xf32>
    %14 = vector.shape_cast %13 : vector<1x8x1x128xf32> to vector<8x1x128xf32>
    %15 = vector.shape_cast %12 : vector<8x1x128xf32> to vector<1x8x1x128xf32>
    tpu.vector_store %arg11[%c0_12, %c1_13, %c9_14, %c0_15], %15 {strides = array<i32>} : memref<4x10x10x128xf32, #tpu.memory_space<vmem>>, vector<1x8x1x128xf32>,
    %cst_16 = arith.constant 0.000000e+00 : f32
    %16 = vector.broadcast %cst_16 : f32 to vector<1x10x128xf32>
    %c1_17 = arith.constant 1 : index
    %c0_18 = arith.constant 0 : index
    %c0_19 = arith.constant 0 : index
    %c0_20 = arith.constant 0 : index
    %17 = vector.load %arg11[%c1_17, %c0_18, %c0_19, %c0_20] : memref<4x10x10x128xf32, #tpu.memory_space<vmem>>, vector<1x1x10x128xf32>
    %18 = vector.shape_cast %17 : vector<1x1x10x128xf32> to vector<1x10x128xf32>
    %19 = vector.shape_cast %16 : vector<1x10x128xf32> to vector<1x1x10x128xf32>
    tpu.vector_store %arg11[%c1_17, %c0_18, %c0_19, %c0_20], %19 {strides = array<i32>} : memref<4x10x10x128xf32, #tpu.memory_space<vmem>>, vector<1x1x10x128xf32>,
    %cst_21 = arith.constant 0.000000e+00 : f32
    %20 = vector.broadcast %cst_21 : f32 to vector<1x10x128xf32>
    %c1_22 = arith.constant 1 : index
    %c9_23 = arith.constant 9 : index
    %c0_24 = arith.constant 0 : index
    %c0_25 = arith.constant 0 : index
    %21 = vector.load %arg11[%c1_22, %c9_23, %c0_24, %c0_25] : memref<4x10x10x128xf32, #tpu.memory_space<vmem>>, vector<1x1x10x128xf32>
    %22 = vector.shape_cast %21 : vector<1x1x10x128xf32> to vector<1x10x128xf32>
    %23 = vector.shape_cast %20 : vector<1x10x128xf32> to vector<1x1x10x128xf32>
    tpu.vector_store %arg11[%c1_22, %c9_23, %c0_24, %c0_25], %23 {strides = array<i32>} : memref<4x10x10x128xf32, #tpu.memory_space<vmem>>, vector<1x1x10x128xf32>,
    %cst_26 = arith.constant 0.000000e+00 : f32
    %24 = vector.broadcast %cst_26 : f32 to vector<8x1x128xf32>
    %c1_27 = arith.constant 1 : index
    %c1_28 = arith.constant 1 : index
    %c0_29 = arith.constant 0 : index
    %c0_30 = arith.constant 0 : index
    %25 = vector.load %arg11[%c1_27, %c1_28, %c0_29, %c0_30] : memref<4x10x10x128xf32, #tpu.memory_space<vmem>>, vector<1x8x1x128xf32>
    %26 = vector.shape_cast %25 : vector<1x8x1x128xf32> to vector<8x1x128xf32>
    %27 = vector.shape_cast %24 : vector<8x1x128xf32> to vector<1x8x1x128xf32>
    tpu.vector_store %arg11[%c1_27, %c1_28, %c0_29, %c0_30], %27 {strides = array<i32>} : memref<4x10x10x128xf32, #tpu.memory_space<vmem>>, vector<1x8x1x128xf32>,
    %cst_31 = arith.constant 0.000000e+00 : f32
    %28 = vector.broadcast %cst_31 : f32 to vector<8x1x128xf32>
    %c1_32 = arith.constant 1 : index
    %c1_33 = arith.constant 1 : index
    %c9_34 = arith.constant 9 : index
    %c0_35 = arith.constant 0 : index
    %29 = vector.load %arg11[%c1_32, %c1_33, %c9_34, %c0_35] : memref<4x10x10x128xf32, #tpu.memory_space<vmem>>, vector<1x8x1x128xf32>
    %30 = vector.shape_cast %29 : vector<1x8x1x128xf32> to vector<8x1x128xf32>
    %31 = vector.shape_cast %28 : vector<8x1x128xf32> to vector<1x8x1x128xf32>
    tpu.vector_store %arg11[%c1_32, %c1_33, %c9_34, %c0_35], %31 {strides = array<i32>} : memref<4x10x10x128xf32, #tpu.memory_space<vmem>>, vector<1x8x1x128xf32>,
    %cst_36 = arith.constant 0.000000e+00 : f32
    %32 = vector.broadcast %cst_36 : f32 to vector<1x10x128xf32>
    %c2 = arith.constant 2 : index
    %c0_37 = arith.constant 0 : index
    %c0_38 = arith.constant 0 : index
    %c0_39 = arith.constant 0 : index
    %33 = vector.load %arg11[%c2, %c0_37, %c0_38, %c0_39] : memref<4x10x10x128xf32, #tpu.memory_space<vmem>>, vector<1x1x10x128xf32>
    %34 = vector.shape_cast %33 : vector<1x1x10x128xf32> to vector<1x10x128xf32>
    %35 = vector.shape_cast %32 : vector<1x10x128xf32> to vector<1x1x10x128xf32>
    tpu.vector_store %arg11[%c2, %c0_37, %c0_38, %c0_39], %35 {strides = array<i32>} : memref<4x10x10x128xf32, #tpu.memory_space<vmem>>, vector<1x1x10x128xf32>,
    %cst_40 = arith.constant 0.000000e+00 : f32
    %36 = vector.broadcast %cst_40 : f32 to vector<1x10x128xf32>
    %c2_41 = arith.constant 2 : index
    %c9_42 = arith.constant 9 : index
    %c0_43 = arith.constant 0 : index
    %c0_44 = arith.constant 0 : index
    %37 = vector.load %arg11[%c2_41, %c9_42, %c0_43, %c0_44] : memref<4x10x10x128xf32, #tpu.memory_space<vmem>>, vector<1x1x10x128xf32>
    %38 = vector.shape_cast %37 : vector<1x1x10x128xf32> to vector<1x10x128xf32>
    %39 = vector.shape_cast %36 : vector<1x10x128xf32> to vector<1x1x10x128xf32>
    tpu.vector_store %arg11[%c2_41, %c9_42, %c0_43, %c0_44], %39 {strides = array<i32>} : memref<4x10x10x128xf32, #tpu.memory_space<vmem>>, vector<1x1x10x128xf32>,
    %cst_45 = arith.constant 0.000000e+00 : f32
    %40 = vector.broadcast %cst_45 : f32 to vector<8x1x128xf32>
    %c2_46 = arith.constant 2 : index
    %c1_47 = arith.constant 1 : index
    %c0_48 = arith.constant 0 : index
    %c0_49 = arith.constant 0 : index
    %41 = vector.load %arg11[%c2_46, %c1_47, %c0_48, %c0_49] : memref<4x10x10x128xf32, #tpu.memory_space<vmem>>, vector<1x8x1x128xf32>
    %42 = vector.shape_cast %41 : vector<1x8x1x128xf32> to vector<8x1x128xf32>
    %43 = vector.shape_cast %40 : vector<8x1x128xf32> to vector<1x8x1x128xf32>
    tpu.vector_store %arg11[%c2_46, %c1_47, %c0_48, %c0_49], %43 {strides = array<i32>} : memref<4x10x10x128xf32, #tpu.memory_space<vmem>>, vector<1x8x1x128xf32>,
    %cst_50 = arith.constant 0.000000e+00 : f32
    %44 = vector.broadcast %cst_50 : f32 to vector<8x1x128xf32>
    %c2_51 = arith.constant 2 : index
    %c1_52 = arith.constant 1 : index
    %c9_53 = arith.constant 9 : index
    %c0_54 = arith.constant 0 : index
    %45 = vector.load %arg11[%c2_51, %c1_52, %c9_53, %c0_54] : memref<4x10x10x128xf32, #tpu.memory_space<vmem>>, vector<1x8x1x128xf32>
    %46 = vector.shape_cast %45 : vector<1x8x1x128xf32> to vector<8x1x128xf32>
    %47 = vector.shape_cast %44 : vector<8x1x128xf32> to vector<1x8x1x128xf32>
    tpu.vector_store %arg11[%c2_51, %c1_52, %c9_53, %c0_54], %47 {strides = array<i32>} : memref<4x10x10x128xf32, #tpu.memory_space<vmem>>, vector<1x8x1x128xf32>,
    %cst_55 = arith.constant 0.000000e+00 : f32
    %48 = vector.broadcast %cst_55 : f32 to vector<1x10x128xf32>
    %c3 = arith.constant 3 : index
    %c0_56 = arith.constant 0 : index
    %c0_57 = arith.constant 0 : index
    %c0_58 = arith.constant 0 : index
    %49 = vector.load %arg11[%c3, %c0_56, %c0_57, %c0_58] : memref<4x10x10x128xf32, #tpu.memory_space<vmem>>, vector<1x1x10x128xf32>
    %50 = vector.shape_cast %49 : vector<1x1x10x128xf32> to vector<1x10x128xf32>
    %51 = vector.shape_cast %48 : vector<1x10x128xf32> to vector<1x1x10x128xf32>
    tpu.vector_store %arg11[%c3, %c0_56, %c0_57, %c0_58], %51 {strides = array<i32>} : memref<4x10x10x128xf32, #tpu.memory_space<vmem>>, vector<1x1x10x128xf32>,
    %cst_59 = arith.constant 0.000000e+00 : f32
    %52 = vector.broadcast %cst_59 : f32 to vector<1x10x128xf32>
    %c3_60 = arith.constant 3 : index
    %c9_61 = arith.constant 9 : index
    %c0_62 = arith.constant 0 : index
    %c0_63 = arith.constant 0 : index
    %53 = vector.load %arg11[%c3_60, %c9_61, %c0_62, %c0_63] : memref<4x10x10x128xf32, #tpu.memory_space<vmem>>, vector<1x1x10x128xf32>
    %54 = vector.shape_cast %53 : vector<1x1x10x128xf32> to vector<1x10x128xf32>
    %55 = vector.shape_cast %52 : vector<1x10x128xf32> to vector<1x1x10x128xf32>
    tpu.vector_store %arg11[%c3_60, %c9_61, %c0_62, %c0_63], %55 {strides = array<i32>} : memref<4x10x10x128xf32, #tpu.memory_space<vmem>>, vector<1x1x10x128xf32>,
    %cst_64 = arith.constant 0.000000e+00 : f32
    %56 = vector.broadcast %cst_64 : f32 to vector<8x1x128xf32>
    %c3_65 = arith.constant 3 : index
    %c1_66 = arith.constant 1 : index
    %c0_67 = arith.constant 0 : index
    %c0_68 = arith.constant 0 : index
    %57 = vector.load %arg11[%c3_65, %c1_66, %c0_67, %c0_68] : memref<4x10x10x128xf32, #tpu.memory_space<vmem>>, vector<1x8x1x128xf32>
    %58 = vector.shape_cast %57 : vector<1x8x1x128xf32> to vector<8x1x128xf32>
    %59 = vector.shape_cast %56 : vector<8x1x128xf32> to vector<1x8x1x128xf32>
    tpu.vector_store %arg11[%c3_65, %c1_66, %c0_67, %c0_68], %59 {strides = array<i32>} : memref<4x10x10x128xf32, #tpu.memory_space<vmem>>, vector<1x8x1x128xf32>,
    %cst_69 = arith.constant 0.000000e+00 : f32
    %60 = vector.broadcast %cst_69 : f32 to vector<8x1x128xf32>
    %c3_70 = arith.constant 3 : index
    %c1_71 = arith.constant 1 : index
    %c9_72 = arith.constant 9 : index
    %c0_73 = arith.constant 0 : index
    %61 = vector.load %arg11[%c3_70, %c1_71, %c9_72, %c0_73] : memref<4x10x10x128xf32, #tpu.memory_space<vmem>>, vector<1x8x1x128xf32>
    %62 = vector.shape_cast %61 : vector<1x8x1x128xf32> to vector<8x1x128xf32>
    %63 = vector.shape_cast %60 : vector<8x1x128xf32> to vector<1x8x1x128xf32>
    tpu.vector_store %arg11[%c3_70, %c1_71, %c9_72, %c0_73], %63 {strides = array<i32>} : memref<4x10x10x128xf32, #tpu.memory_space<vmem>>, vector<1x8x1x128xf32>,
    %c0_74 = arith.constant 0 : index
    %c0_75 = arith.constant 0 : index
    %c0_76 = arith.constant 0 : index
    %64 = vector.load %arg1[%c0_74, %c0_75, %c0_76] : memref<1x256x16xbf16, #tpu.memory_space<vmem>>, vector<1x256x16xbf16>
    %65 = vector.shape_cast %64 : vector<1x256x16xbf16> to vector<256x16xbf16>
    %c0_77 = arith.constant 0 : index
    %c0_78 = arith.constant 0 : index
    %66 = vector.load %arg2[%c0_77, %c0_78] : memref<16x128xbf16, #tpu.memory_space<vmem>>, vector<16x128xbf16>
    %cst_79 = arith.constant dense<0.000000e+00> : vector<256x128xf32>
    %67 = tpu.matmul %65, %66, %cst_79 {dimension_numbers = #tpu.dot_dimension_numbers<[1], [0], [0], [1], [0, 0, 1, 1], [], []>} : vector<256x16xbf16>, vector<16x128xbf16>, vector<256x128xf32> -> vector<256x128xf32>
    %c0_80 = arith.constant 0 : index
    %c0_81 = arith.constant 0 : index
    %68 = vector.load %arg3[%c0_80, %c0_81] : memref<1x128xf32, #tpu.memory_space<vmem>>, vector<1x128xf32>
    %69 = vector.broadcast %68 : vector<1x128xf32> to vector<256x128xf32>
    %70 = arith.addf %67, %69 : vector<256x128xf32>
    %cst_82 = arith.constant 3.000000e+00 : f32
    %71 = vector.broadcast %cst_82 : f32 to vector<256x128xf32>
    %72 = arith.addf %70, %71 : vector<256x128xf32>
    %cst_83 = arith.constant 0.000000e+00 : f32
    %cst_84 = arith.constant 6.000000e+00 : f32
    %73 = vector.broadcast %cst_83 : f32 to vector<256x128xf32>
    %74 = arith.maximumf %73, %72 : vector<256x128xf32>
    %75 = vector.broadcast %cst_84 : f32 to vector<256x128xf32>
    %76 = arith.minimumf %75, %74 : vector<256x128xf32>
    %77 = arith.mulf %70, %76 : vector<256x128xf32>
    %cst_85 = arith.constant 0.166666672 : f32
    %78 = vector.broadcast %cst_85 : f32 to vector<256x128xf32>
    %79 = arith.mulf %77, %78 : vector<256x128xf32>
    %80 = vector.extract_strided_slice %79 {offsets = [0, 0], sizes = [64, 128], strides = [1, 1]} : vector<256x128xf32> to vector<64x128xf32>
    %81 = vector.shape_cast %80 : vector<64x128xf32> to vector<8x8x128xf32>
    %c0_86 = arith.constant 0 : index
    %c1_87 = arith.constant 1 : index
    %c1_88 = arith.constant 1 : index
    %c0_89 = arith.constant 0 : index
    %82 = vector.load %arg11[%c0_86, %c1_87, %c1_88, %c0_89] : memref<4x10x10x128xf32, #tpu.memory_space<vmem>>, vector<1x8x8x128xf32>
    %83 = vector.shape_cast %82 : vector<1x8x8x128xf32> to vector<8x8x128xf32>
    %84 = vector.shape_cast %81 : vector<8x8x128xf32> to vector<1x8x8x128xf32>
    tpu.vector_store %arg11[%c0_86, %c1_87, %c1_88, %c0_89], %84 {strides = array<i32>} : memref<4x10x10x128xf32, #tpu.memory_space<vmem>>, vector<1x8x8x128xf32>,
    %85 = vector.extract_strided_slice %79 {offsets = [64, 0], sizes = [64, 128], strides = [1, 1]} : vector<256x128xf32> to vector<64x128xf32>
    %86 = vector.shape_cast %85 : vector<64x128xf32> to vector<8x8x128xf32>
    %c1_90 = arith.constant 1 : index
    %c1_91 = arith.constant 1 : index
    %c1_92 = arith.constant 1 : index
    %c0_93 = arith.constant 0 : index
    %87 = vector.load %arg11[%c1_90, %c1_91, %c1_92, %c0_93] : memref<4x10x10x128xf32, #tpu.memory_space<vmem>>, vector<1x8x8x128xf32>
    %88 = vector.shape_cast %87 : vector<1x8x8x128xf32> to vector<8x8x128xf32>
    %89 = vector.shape_cast %86 : vector<8x8x128xf32> to vector<1x8x8x128xf32>
    tpu.vector_store %arg11[%c1_90, %c1_91, %c1_92, %c0_93], %89 {strides = array<i32>} : memref<4x10x10x128xf32, #tpu.memory_space<vmem>>, vector<1x8x8x128xf32>,
    %90 = vector.extract_strided_slice %79 {offsets = [128, 0], sizes = [64, 128], strides = [1, 1]} : vector<256x128xf32> to vector<64x128xf32>
    %91 = vector.shape_cast %90 : vector<64x128xf32> to vector<8x8x128xf32>
    %c2_94 = arith.constant 2 : index
    %c1_95 = arith.constant 1 : index
    %c1_96 = arith.constant 1 : index
    %c0_97 = arith.constant 0 : index
    %92 = vector.load %arg11[%c2_94, %c1_95, %c1_96, %c0_97] : memref<4x10x10x128xf32, #tpu.memory_space<vmem>>, vector<1x8x8x128xf32>
    %93 = vector.shape_cast %92 : vector<1x8x8x128xf32> to vector<8x8x128xf32>
    %94 = vector.shape_cast %91 : vector<8x8x128xf32> to vector<1x8x8x128xf32>
    tpu.vector_store %arg11[%c2_94, %c1_95, %c1_96, %c0_97], %94 {strides = array<i32>} : memref<4x10x10x128xf32, #tpu.memory_space<vmem>>, vector<1x8x8x128xf32>,
    %95 = vector.extract_strided_slice %79 {offsets = [192, 0], sizes = [64, 128], strides = [1, 1]} : vector<256x128xf32> to vector<64x128xf32>
    %96 = vector.shape_cast %95 : vector<64x128xf32> to vector<8x8x128xf32>
    %c3_98 = arith.constant 3 : index
    %c1_99 = arith.constant 1 : index
    %c1_100 = arith.constant 1 : index
    %c0_101 = arith.constant 0 : index
    %97 = vector.load %arg11[%c3_98, %c1_99, %c1_100, %c0_101] : memref<4x10x10x128xf32, #tpu.memory_space<vmem>>, vector<1x8x8x128xf32>
    %98 = vector.shape_cast %97 : vector<1x8x8x128xf32> to vector<8x8x128xf32>
    %99 = vector.shape_cast %96 : vector<8x8x128xf32> to vector<1x8x8x128xf32>
    tpu.vector_store %arg11[%c3_98, %c1_99, %c1_100, %c0_101], %99 {strides = array<i32>} : memref<4x10x10x128xf32, #tpu.memory_space<vmem>>, vector<1x8x8x128xf32>,
    %c0_102 = arith.constant 0 : index
    %c0_103 = arith.constant 0 : index
    %c0_104 = arith.constant 0 : index
    %c0_105 = arith.constant 0 : index
    %100 = vector.load %arg11[%c0_102, %c0_103, %c0_104, %c0_105] : memref<4x10x10x128xf32, #tpu.memory_space<vmem>>, vector<1x8x8x128xf32>
    %101 = vector.shape_cast %100 : vector<1x8x8x128xf32> to vector<8x8x128xf32>
    %c0_106 = arith.constant 0 : index
    %c0_107 = arith.constant 0 : index
    %102 = vector.load %arg4[%c0_106, %c0_107] : memref<25x128xf32, #tpu.memory_space<vmem>>, vector<1x128xf32>
    %103 = vector.shape_cast %102 : vector<1x128xf32> to vector<128xf32>
    %104 = vector.shape_cast %103 : vector<128xf32> to vector<1x1x128xf32>
    %105 = vector.broadcast %104 : vector<1x1x128xf32> to vector<8x8x128xf32>
    %106 = arith.mulf %101, %105 : vector<8x8x128xf32>
    %c1_108 = arith.constant 1 : index
    %c0_109 = arith.constant 0 : index
    %c0_110 = arith.constant 0 : index
    %c0_111 = arith.constant 0 : index
    %107 = vector.load %arg11[%c1_108, %c0_109, %c0_110, %c0_111] : memref<4x10x10x128xf32, #tpu.memory_space<vmem>>, vector<1x8x8x128xf32>
    %108 = vector.shape_cast %107 : vector<1x8x8x128xf32> to vector<8x8x128xf32>
    %c1_112 = arith.constant 1 : index
    %c0_113 = arith.constant 0 : index
    %109 = vector.load %arg4[%c1_112, %c0_113] : memref<25x128xf32, #tpu.memory_space<vmem>>, vector<1x128xf32>
    %110 = vector.shape_cast %109 : vector<1x128xf32> to vector<128xf32>
    %111 = vector.shape_cast %110 : vector<128xf32> to vector<1x1x128xf32>
    %112 = vector.broadcast %111 : vector<1x1x128xf32> to vector<8x8x128xf32>
    %113 = arith.mulf %108, %112 : vector<8x8x128xf32>
    %114 = arith.addf %106, %113 : vector<8x8x128xf32>
    %c0_114 = arith.constant 0 : index
    %c0_115 = arith.constant 0 : index
    %c1_116 = arith.constant 1 : index
    %c0_117 = arith.constant 0 : index
    %115 = vector.load %arg11[%c0_114, %c0_115, %c1_116, %c0_117] : memref<4x10x10x128xf32, #tpu.memory_space<vmem>>, vector<1x8x8x128xf32>
    %116 = vector.shape_cast %115 : vector<1x8x8x128xf32> to vector<8x8x128xf32>
    %c2_118 = arith.constant 2 : index
    %c0_119 = arith.constant 0 : index
    %117 = vector.load %arg4[%c2_118, %c0_119] : memref<25x128xf32, #tpu.memory_space<vmem>>, vector<1x128xf32>
    %118 = vector.shape_cast %117 : vector<1x128xf32> to vector<128xf32>
    %119 = vector.shape_cast %118 : vector<128xf32> to vector<1x1x128xf32>
    %120 = vector.broadcast %119 : vector<1x1x128xf32> to vector<8x8x128xf32>
    %121 = arith.mulf %116, %120 : vector<8x8x128xf32>
    %122 = arith.addf %114, %121 : vector<8x8x128xf32>
    %c1_120 = arith.constant 1 : index
    %c0_121 = arith.constant 0 : index
    %c1_122 = arith.constant 1 : index
    %c0_123 = arith.constant 0 : index
    %123 = vector.load %arg11[%c1_120, %c0_121, %c1_122, %c0_123] : memref<4x10x10x128xf32, #tpu.memory_space<vmem>>, vector<1x8x8x128xf32>
    %124 = vector.shape_cast %123 : vector<1x8x8x128xf32> to vector<8x8x128xf32>
    %c3_124 = arith.constant 3 : index
    %c0_125 = arith.constant 0 : index
    %125 = vector.load %arg4[%c3_124, %c0_125] : memref<25x128xf32, #tpu.memory_space<vmem>>, vector<1x128xf32>
    %126 = vector.shape_cast %125 : vector<1x128xf32> to vector<128xf32>
    %127 = vector.shape_cast %126 : vector<128xf32> to vector<1x1x128xf32>
    %128 = vector.broadcast %127 : vector<1x1x128xf32> to vector<8x8x128xf32>
    %129 = arith.mulf %124, %128 : vector<8x8x128xf32>
    %130 = arith.addf %122, %129 : vector<8x8x128xf32>
    %c0_126 = arith.constant 0 : index
    %c0_127 = arith.constant 0 : index
    %c2_128 = arith.constant 2 : index
    %c0_129 = arith.constant 0 : index
    %131 = vector.load %arg11[%c0_126, %c0_127, %c2_128, %c0_129] : memref<4x10x10x128xf32, #tpu.memory_space<vmem>>, vector<1x8x8x128xf32>
    %132 = vector.shape_cast %131 : vector<1x8x8x128xf32> to vector<8x8x128xf32>
    %c4 = arith.constant 4 : index
    %c0_130 = arith.constant 0 : index
    %133 = vector.load %arg4[%c4, %c0_130] : memref<25x128xf32, #tpu.memory_space<vmem>>, vector<1x128xf32>
    %134 = vector.shape_cast %133 : vector<1x128xf32> to vector<128xf32>
    %135 = vector.shape_cast %134 : vector<128xf32> to vector<1x1x128xf32>
    %136 = vector.broadcast %135 : vector<1x1x128xf32> to vector<8x8x128xf32>
    %137 = arith.mulf %132, %136 : vector<8x8x128xf32>
    %138 = arith.addf %130, %137 : vector<8x8x128xf32>
    %c2_131 = arith.constant 2 : index
    %c0_132 = arith.constant 0 : index
    %c0_133 = arith.constant 0 : index
    %c0_134 = arith.constant 0 : index
    %139 = vector.load %arg11[%c2_131, %c0_132, %c0_133, %c0_134] : memref<4x10x10x128xf32, #tpu.memory_space<vmem>>, vector<1x8x8x128xf32>
    %140 = vector.shape_cast %139 : vector<1x8x8x128xf32> to vector<8x8x128xf32>
    %c5 = arith.constant 5 : index
    %c0_135 = arith.constant 0 : index
    %141 = vector.load %arg4[%c5, %c0_135] : memref<25x128xf32, #tpu.memory_space<vmem>>, vector<1x128xf32>
    %142 = vector.shape_cast %141 : vector<1x128xf32> to vector<128xf32>
    %143 = vector.shape_cast %142 : vector<128xf32> to vector<1x1x128xf32>
    %144 = vector.broadcast %143 : vector<1x1x128xf32> to vector<8x8x128xf32>
    %145 = arith.mulf %140, %144 : vector<8x8x128xf32>
    %146 = arith.addf %138, %145 : vector<8x8x128xf32>
    %c3_136 = arith.constant 3 : index
    %c0_137 = arith.constant 0 : index
    %c0_138 = arith.constant 0 : index
    %c0_139 = arith.constant 0 : index
    %147 = vector.load %arg11[%c3_136, %c0_137, %c0_138, %c0_139] : memref<4x10x10x128xf32, #tpu.memory_space<vmem>>, vector<1x8x8x128xf32>
    %148 = vector.shape_cast %147 : vector<1x8x8x128xf32> to vector<8x8x128xf32>
    %c6 = arith.constant 6 : index
    %c0_140 = arith.constant 0 : index
    %149 = vector.load %arg4[%c6, %c0_140] : memref<25x128xf32, #tpu.memory_space<vmem>>, vector<1x128xf32>
    %150 = vector.shape_cast %149 : vector<1x128xf32> to vector<128xf32>
    %151 = vector.shape_cast %150 : vector<128xf32> to vector<1x1x128xf32>
    %152 = vector.broadcast %151 : vector<1x1x128xf32> to vector<8x8x128xf32>
    %153 = arith.mulf %148, %152 : vector<8x8x128xf32>
    %154 = arith.addf %146, %153 : vector<8x8x128xf32>
    %c2_141 = arith.constant 2 : index
    %c0_142 = arith.constant 0 : index
    %c1_143 = arith.constant 1 : index
    %c0_144 = arith.constant 0 : index
    %155 = vector.load %arg11[%c2_141, %c0_142, %c1_143, %c0_144] : memref<4x10x10x128xf32, #tpu.memory_space<vmem>>, vector<1x8x8x128xf32>
    %156 = vector.shape_cast %155 : vector<1x8x8x128xf32> to vector<8x8x128xf32>
    %c7 = arith.constant 7 : index
    %c0_145 = arith.constant 0 : index
    %157 = vector.load %arg4[%c7, %c0_145] : memref<25x128xf32, #tpu.memory_space<vmem>>, vector<1x128xf32>
    %158 = vector.shape_cast %157 : vector<1x128xf32> to vector<128xf32>
    %159 = vector.shape_cast %158 : vector<128xf32> to vector<1x1x128xf32>
    %160 = vector.broadcast %159 : vector<1x1x128xf32> to vector<8x8x128xf32>
    %161 = arith.mulf %156, %160 : vector<8x8x128xf32>
    %162 = arith.addf %154, %161 : vector<8x8x128xf32>
    %c3_146 = arith.constant 3 : index
    %c0_147 = arith.constant 0 : index
    %c1_148 = arith.constant 1 : index
    %c0_149 = arith.constant 0 : index
    %163 = vector.load %arg11[%c3_146, %c0_147, %c1_148, %c0_149] : memref<4x10x10x128xf32, #tpu.memory_space<vmem>>, vector<1x8x8x128xf32>
    %164 = vector.shape_cast %163 : vector<1x8x8x128xf32> to vector<8x8x128xf32>
    %c8 = arith.constant 8 : index
    %c0_150 = arith.constant 0 : index
    %165 = vector.load %arg4[%c8, %c0_150] : memref<25x128xf32, #tpu.memory_space<vmem>>, vector<1x128xf32>
    %166 = vector.shape_cast %165 : vector<1x128xf32> to vector<128xf32>
    %167 = vector.shape_cast %166 : vector<128xf32> to vector<1x1x128xf32>
    %168 = vector.broadcast %167 : vector<1x1x128xf32> to vector<8x8x128xf32>
    %169 = arith.mulf %164, %168 : vector<8x8x128xf32>
    %170 = arith.addf %162, %169 : vector<8x8x128xf32>
    %c2_151 = arith.constant 2 : index
    %c0_152 = arith.constant 0 : index
    %c2_153 = arith.constant 2 : index
    %c0_154 = arith.constant 0 : index
    %171 = vector.load %arg11[%c2_151, %c0_152, %c2_153, %c0_154] : memref<4x10x10x128xf32, #tpu.memory_space<vmem>>, vector<1x8x8x128xf32>
    %172 = vector.shape_cast %171 : vector<1x8x8x128xf32> to vector<8x8x128xf32>
    %c9_155 = arith.constant 9 : index
    %c0_156 = arith.constant 0 : index
    %173 = vector.load %arg4[%c9_155, %c0_156] : memref<25x128xf32, #tpu.memory_space<vmem>>, vector<1x128xf32>
    %174 = vector.shape_cast %173 : vector<1x128xf32> to vector<128xf32>
    %175 = vector.shape_cast %174 : vector<128xf32> to vector<1x1x128xf32>
    %176 = vector.broadcast %175 : vector<1x1x128xf32> to vector<8x8x128xf32>
    %177 = arith.mulf %172, %176 : vector<8x8x128xf32>
    %178 = arith.addf %170, %177 : vector<8x8x128xf32>
    %c0_157 = arith.constant 0 : index
    %c1_158 = arith.constant 1 : index
    %c0_159 = arith.constant 0 : index
    %c0_160 = arith.constant 0 : index
    %179 = vector.load %arg11[%c0_157, %c1_158, %c0_159, %c0_160] : memref<4x10x10x128xf32, #tpu.memory_space<vmem>>, vector<1x8x8x128xf32>
    %180 = vector.shape_cast %179 : vector<1x8x8x128xf32> to vector<8x8x128xf32>
    %c10 = arith.constant 10 : index
    %c0_161 = arith.constant 0 : index
    %181 = vector.load %arg4[%c10, %c0_161] : memref<25x128xf32, #tpu.memory_space<vmem>>, vector<1x128xf32>
    %182 = vector.shape_cast %181 : vector<1x128xf32> to vector<128xf32>
    %183 = vector.shape_cast %182 : vector<128xf32> to vector<1x1x128xf32>
    %184 = vector.broadcast %183 : vector<1x1x128xf32> to vector<8x8x128xf32>
    %185 = arith.mulf %180, %184 : vector<8x8x128xf32>
    %186 = arith.addf %178, %185 : vector<8x8x128xf32>
    %c1_162 = arith.constant 1 : index
    %c1_163 = arith.constant 1 : index
    %c0_164 = arith.constant 0 : index
    %c0_165 = arith.constant 0 : index
    %187 = vector.load %arg11[%c1_162, %c1_163, %c0_164, %c0_165] : memref<4x10x10x128xf32, #tpu.memory_space<vmem>>, vector<1x8x8x128xf32>
    %188 = vector.shape_cast %187 : vector<1x8x8x128xf32> to vector<8x8x128xf32>
    %c11 = arith.constant 11 : index
    %c0_166 = arith.constant 0 : index
    %189 = vector.load %arg4[%c11, %c0_166] : memref<25x128xf32, #tpu.memory_space<vmem>>, vector<1x128xf32>
    %190 = vector.shape_cast %189 : vector<1x128xf32> to vector<128xf32>
    %191 = vector.shape_cast %190 : vector<128xf32> to vector<1x1x128xf32>
    %192 = vector.broadcast %191 : vector<1x1x128xf32> to vector<8x8x128xf32>
    %193 = arith.mulf %188, %192 : vector<8x8x128xf32>
    %194 = arith.addf %186, %193 : vector<8x8x128xf32>
    %c0_167 = arith.constant 0 : index
    %c1_168 = arith.constant 1 : index
    %c1_169 = arith.constant 1 : index
    %c0_170 = arith.constant 0 : index
    %195 = vector.load %arg11[%c0_167, %c1_168, %c1_169, %c0_170] : memref<4x10x10x128xf32, #tpu.memory_space<vmem>>, vector<1x8x8x128xf32>
    %196 = vector.shape_cast %195 : vector<1x8x8x128xf32> to vector<8x8x128xf32>
    %c12 = arith.constant 12 : index
    %c0_171 = arith.constant 0 : index
    %197 = vector.load %arg4[%c12, %c0_171] : memref<25x128xf32, #tpu.memory_space<vmem>>, vector<1x128xf32>
    %198 = vector.shape_cast %197 : vector<1x128xf32> to vector<128xf32>
    %199 = vector.shape_cast %198 : vector<128xf32> to vector<1x1x128xf32>
    %200 = vector.broadcast %199 : vector<1x1x128xf32> to vector<8x8x128xf32>
    %201 = arith.mulf %196, %200 : vector<8x8x128xf32>
    %202 = arith.addf %194, %201 : vector<8x8x128xf32>
    %c1_172 = arith.constant 1 : index
    %c1_173 = arith.constant 1 : index
    %c1_174 = arith.constant 1 : index
    %c0_175 = arith.constant 0 : index
    %203 = vector.load %arg11[%c1_172, %c1_173, %c1_174, %c0_175] : memref<4x10x10x128xf32, #tpu.memory_space<vmem>>, vector<1x8x8x128xf32>
    %204 = vector.shape_cast %203 : vector<1x8x8x128xf32> to vector<8x8x128xf32>
    %c13 = arith.constant 13 : index
    %c0_176 = arith.constant 0 : index
    %205 = vector.load %arg4[%c13, %c0_176] : memref<25x128xf32, #tpu.memory_space<vmem>>, vector<1x128xf32>
    %206 = vector.shape_cast %205 : vector<1x128xf32> to vector<128xf32>
    %207 = vector.shape_cast %206 : vector<128xf32> to vector<1x1x128xf32>
    %208 = vector.broadcast %207 : vector<1x1x128xf32> to vector<8x8x128xf32>
    %209 = arith.mulf %204, %208 : vector<8x8x128xf32>
    %210 = arith.addf %202, %209 : vector<8x8x128xf32>
    %c0_177 = arith.constant 0 : index
    %c1_178 = arith.constant 1 : index
    %c2_179 = arith.constant 2 : index
    %c0_180 = arith.constant 0 : index
    %211 = vector.load %arg11[%c0_177, %c1_178, %c2_179, %c0_180] : memref<4x10x10x128xf32, #tpu.memory_space<vmem>>, vector<1x8x8x128xf32>
    %212 = vector.shape_cast %211 : vector<1x8x8x128xf32> to vector<8x8x128xf32>
    %c14 = arith.constant 14 : index
    %c0_181 = arith.constant 0 : index
    %213 = vector.load %arg4[%c14, %c0_181] : memref<25x128xf32, #tpu.memory_space<vmem>>, vector<1x128xf32>
    %214 = vector.shape_cast %213 : vector<1x128xf32> to vector<128xf32>
    %215 = vector.shape_cast %214 : vector<128xf32> to vector<1x1x128xf32>
    %216 = vector.broadcast %215 : vector<1x1x128xf32> to vector<8x8x128xf32>
    %217 = arith.mulf %212, %216 : vector<8x8x128xf32>
    %218 = arith.addf %210, %217 : vector<8x8x128xf32>
    %c2_182 = arith.constant 2 : index
    %c1_183 = arith.constant 1 : index
    %c0_184 = arith.constant 0 : index
    %c0_185 = arith.constant 0 : index
    %219 = vector.load %arg11[%c2_182, %c1_183, %c0_184, %c0_185] : memref<4x10x10x128xf32, #tpu.memory_space<vmem>>, vector<1x8x8x128xf32>
    %220 = vector.shape_cast %219 : vector<1x8x8x128xf32> to vector<8x8x128xf32>
    %c15 = arith.constant 15 : index
    %c0_186 = arith.constant 0 : index
    %221 = vector.load %arg4[%c15, %c0_186] : memref<25x128xf32, #tpu.memory_space<vmem>>, vector<1x128xf32>
    %222 = vector.shape_cast %221 : vector<1x128xf32> to vector<128xf32>
    %223 = vector.shape_cast %222 : vector<128xf32> to vector<1x1x128xf32>
    %224 = vector.broadcast %223 : vector<1x1x128xf32> to vector<8x8x128xf32>
    %225 = arith.mulf %220, %224 : vector<8x8x128xf32>
    %226 = arith.addf %218, %225 : vector<8x8x128xf32>
    %c3_187 = arith.constant 3 : index
    %c1_188 = arith.constant 1 : index
    %c0_189 = arith.constant 0 : index
    %c0_190 = arith.constant 0 : index
    %227 = vector.load %arg11[%c3_187, %c1_188, %c0_189, %c0_190] : memref<4x10x10x128xf32, #tpu.memory_space<vmem>>, vector<1x8x8x128xf32>
    %228 = vector.shape_cast %227 : vector<1x8x8x128xf32> to vector<8x8x128xf32>
    %c16 = arith.constant 16 : index
    %c0_191 = arith.constant 0 : index
    %229 = vector.load %arg4[%c16, %c0_191] : memref<25x128xf32, #tpu.memory_space<vmem>>, vector<1x128xf32>
    %230 = vector.shape_cast %229 : vector<1x128xf32> to vector<128xf32>
    %231 = vector.shape_cast %230 : vector<128xf32> to vector<1x1x128xf32>
    %232 = vector.broadcast %231 : vector<1x1x128xf32> to vector<8x8x128xf32>
    %233 = arith.mulf %228, %232 : vector<8x8x128xf32>
    %234 = arith.addf %226, %233 : vector<8x8x128xf32>
    %c2_192 = arith.constant 2 : index
    %c1_193 = arith.constant 1 : index
    %c1_194 = arith.constant 1 : index
    %c0_195 = arith.constant 0 : index
    %235 = vector.load %arg11[%c2_192, %c1_193, %c1_194, %c0_195] : memref<4x10x10x128xf32, #tpu.memory_space<vmem>>, vector<1x8x8x128xf32>
    %236 = vector.shape_cast %235 : vector<1x8x8x128xf32> to vector<8x8x128xf32>
    %c17 = arith.constant 17 : index
    %c0_196 = arith.constant 0 : index
    %237 = vector.load %arg4[%c17, %c0_196] : memref<25x128xf32, #tpu.memory_space<vmem>>, vector<1x128xf32>
    %238 = vector.shape_cast %237 : vector<1x128xf32> to vector<128xf32>
    %239 = vector.shape_cast %238 : vector<128xf32> to vector<1x1x128xf32>
    %240 = vector.broadcast %239 : vector<1x1x128xf32> to vector<8x8x128xf32>
    %241 = arith.mulf %236, %240 : vector<8x8x128xf32>
    %242 = arith.addf %234, %241 : vector<8x8x128xf32>
    %c3_197 = arith.constant 3 : index
    %c1_198 = arith.constant 1 : index
    %c1_199 = arith.constant 1 : index
    %c0_200 = arith.constant 0 : index
    %243 = vector.load %arg11[%c3_197, %c1_198, %c1_199, %c0_200] : memref<4x10x10x128xf32, #tpu.memory_space<vmem>>, vector<1x8x8x128xf32>
    %244 = vector.shape_cast %243 : vector<1x8x8x128xf32> to vector<8x8x128xf32>
    %c18 = arith.constant 18 : index
    %c0_201 = arith.constant 0 : index
    %245 = vector.load %arg4[%c18, %c0_201] : memref<25x128xf32, #tpu.memory_space<vmem>>, vector<1x128xf32>
    %246 = vector.shape_cast %245 : vector<1x128xf32> to vector<128xf32>
    %247 = vector.shape_cast %246 : vector<128xf32> to vector<1x1x128xf32>
    %248 = vector.broadcast %247 : vector<1x1x128xf32> to vector<8x8x128xf32>
    %249 = arith.mulf %244, %248 : vector<8x8x128xf32>
    %250 = arith.addf %242, %249 : vector<8x8x128xf32>
    %c2_202 = arith.constant 2 : index
    %c1_203 = arith.constant 1 : index
    %c2_204 = arith.constant 2 : index
    %c0_205 = arith.constant 0 : index
    %251 = vector.load %arg11[%c2_202, %c1_203, %c2_204, %c0_205] : memref<4x10x10x128xf32, #tpu.memory_space<vmem>>, vector<1x8x8x128xf32>
    %252 = vector.shape_cast %251 : vector<1x8x8x128xf32> to vector<8x8x128xf32>
    %c19 = arith.constant 19 : index
    %c0_206 = arith.constant 0 : index
    %253 = vector.load %arg4[%c19, %c0_206] : memref<25x128xf32, #tpu.memory_space<vmem>>, vector<1x128xf32>
    %254 = vector.shape_cast %253 : vector<1x128xf32> to vector<128xf32>
    %255 = vector.shape_cast %254 : vector<128xf32> to vector<1x1x128xf32>
    %256 = vector.broadcast %255 : vector<1x1x128xf32> to vector<8x8x128xf32>
    %257 = arith.mulf %252, %256 : vector<8x8x128xf32>
    %258 = arith.addf %250, %257 : vector<8x8x128xf32>
    %c0_207 = arith.constant 0 : index
    %c2_208 = arith.constant 2 : index
    %c0_209 = arith.constant 0 : index
    %c0_210 = arith.constant 0 : index
    %259 = vector.load %arg11[%c0_207, %c2_208, %c0_209, %c0_210] : memref<4x10x10x128xf32, #tpu.memory_space<vmem>>, vector<1x8x8x128xf32>
    %260 = vector.shape_cast %259 : vector<1x8x8x128xf32> to vector<8x8x128xf32>
    %c20 = arith.constant 20 : index
    %c0_211 = arith.constant 0 : index
    %261 = vector.load %arg4[%c20, %c0_211] : memref<25x128xf32, #tpu.memory_space<vmem>>, vector<1x128xf32>
    %262 = vector.shape_cast %261 : vector<1x128xf32> to vector<128xf32>
    %263 = vector.shape_cast %262 : vector<128xf32> to vector<1x1x128xf32>
    %264 = vector.broadcast %263 : vector<1x1x128xf32> to vector<8x8x128xf32>
    %265 = arith.mulf %260, %264 : vector<8x8x128xf32>
    %266 = arith.addf %258, %265 : vector<8x8x128xf32>
    %c1_212 = arith.constant 1 : index
    %c2_213 = arith.constant 2 : index
    %c0_214 = arith.constant 0 : index
    %c0_215 = arith.constant 0 : index
    %267 = vector.load %arg11[%c1_212, %c2_213, %c0_214, %c0_215] : memref<4x10x10x128xf32, #tpu.memory_space<vmem>>, vector<1x8x8x128xf32>
    %268 = vector.shape_cast %267 : vector<1x8x8x128xf32> to vector<8x8x128xf32>
    %c21 = arith.constant 21 : index
    %c0_216 = arith.constant 0 : index
    %269 = vector.load %arg4[%c21, %c0_216] : memref<25x128xf32, #tpu.memory_space<vmem>>, vector<1x128xf32>
    %270 = vector.shape_cast %269 : vector<1x128xf32> to vector<128xf32>
    %271 = vector.shape_cast %270 : vector<128xf32> to vector<1x1x128xf32>
    %272 = vector.broadcast %271 : vector<1x1x128xf32> to vector<8x8x128xf32>
    %273 = arith.mulf %268, %272 : vector<8x8x128xf32>
    %274 = arith.addf %266, %273 : vector<8x8x128xf32>
    %c0_217 = arith.constant 0 : index
    %c2_218 = arith.constant 2 : index
    %c1_219 = arith.constant 1 : index
    %c0_220 = arith.constant 0 : index
    %275 = vector.load %arg11[%c0_217, %c2_218, %c1_219, %c0_220] : memref<4x10x10x128xf32, #tpu.memory_space<vmem>>, vector<1x8x8x128xf32>
    %276 = vector.shape_cast %275 : vector<1x8x8x128xf32> to vector<8x8x128xf32>
    %c22 = arith.constant 22 : index
    %c0_221 = arith.constant 0 : index
    %277 = vector.load %arg4[%c22, %c0_221] : memref<25x128xf32, #tpu.memory_space<vmem>>, vector<1x128xf32>
    %278 = vector.shape_cast %277 : vector<1x128xf32> to vector<128xf32>
    %279 = vector.shape_cast %278 : vector<128xf32> to vector<1x1x128xf32>
    %280 = vector.broadcast %279 : vector<1x1x128xf32> to vector<8x8x128xf32>
    %281 = arith.mulf %276, %280 : vector<8x8x128xf32>
    %282 = arith.addf %274, %281 : vector<8x8x128xf32>
    %c1_222 = arith.constant 1 : index
    %c2_223 = arith.constant 2 : index
    %c1_224 = arith.constant 1 : index
    %c0_225 = arith.constant 0 : index
    %283 = vector.load %arg11[%c1_222, %c2_223, %c1_224, %c0_225] : memref<4x10x10x128xf32, #tpu.memory_space<vmem>>, vector<1x8x8x128xf32>
    %284 = vector.shape_cast %283 : vector<1x8x8x128xf32> to vector<8x8x128xf32>
    %c23 = arith.constant 23 : index
    %c0_226 = arith.constant 0 : index
    %285 = vector.load %arg4[%c23, %c0_226] : memref<25x128xf32, #tpu.memory_space<vmem>>, vector<1x128xf32>
    %286 = vector.shape_cast %285 : vector<1x128xf32> to vector<128xf32>
    %287 = vector.shape_cast %286 : vector<128xf32> to vector<1x1x128xf32>
    %288 = vector.broadcast %287 : vector<1x1x128xf32> to vector<8x8x128xf32>
    %289 = arith.mulf %284, %288 : vector<8x8x128xf32>
    %290 = arith.addf %282, %289 : vector<8x8x128xf32>
    %c0_227 = arith.constant 0 : index
    %c2_228 = arith.constant 2 : index
    %c2_229 = arith.constant 2 : index
    %c0_230 = arith.constant 0 : index
    %291 = vector.load %arg11[%c0_227, %c2_228, %c2_229, %c0_230] : memref<4x10x10x128xf32, #tpu.memory_space<vmem>>, vector<1x8x8x128xf32>
    %292 = vector.shape_cast %291 : vector<1x8x8x128xf32> to vector<8x8x128xf32>
    %c24 = arith.constant 24 : index
    %c0_231 = arith.constant 0 : index
    %293 = vector.load %arg4[%c24, %c0_231] : memref<25x128xf32, #tpu.memory_space<vmem>>, vector<1x128xf32>
    %294 = vector.shape_cast %293 : vector<1x128xf32> to vector<128xf32>
    %295 = vector.shape_cast %294 : vector<128xf32> to vector<1x1x128xf32>
    %296 = vector.broadcast %295 : vector<1x1x128xf32> to vector<8x8x128xf32>
    %297 = arith.mulf %292, %296 : vector<8x8x128xf32>
    %298 = arith.addf %290, %297 : vector<8x8x128xf32>
    %c0_232 = arith.constant 0 : index
    %c0_233 = arith.constant 0 : index
    %299 = vector.load %arg5[%c0_232, %c0_233] : memref<1x128xf32, #tpu.memory_space<vmem>>, vector<1x128xf32>
    %300 = vector.shape_cast %299 : vector<1x128xf32> to vector<128xf32>
    %301 = vector.shape_cast %300 : vector<128xf32> to vector<1x1x128xf32>
    %302 = vector.broadcast %301 : vector<1x1x128xf32> to vector<8x8x128xf32>
    %303 = arith.addf %298, %302 : vector<8x8x128xf32>
    %304 = vector.shape_cast %303 : vector<8x8x128xf32> to vector<64x128xf32>
    %c0_234 = arith.constant 0 : index
    %c0_235 = arith.constant 0 : index
    %305 = vector.load %arg12[%c0_234, %c0_235] : memref<64x128xf32, #tpu.memory_space<vmem>>, vector<64x128xf32>
    tpu.vector_store %arg12[%c0_234, %c0_235], %304 {strides = array<i32>} : memref<64x128xf32, #tpu.memory_space<vmem>>, vector<64x128xf32>,
    %c0_236 = arith.constant 0 : index
    %c0_237 = arith.constant 0 : index
    %306 = vector.load %arg12[%c0_236, %c0_237] : memref<64x128xf32, #tpu.memory_space<vmem>>, vector<64x128xf32>
    %c0_238 = arith.constant 0 : index
    %c0_239 = arith.constant 0 : index
    %307 = vector.load %arg12[%c0_238, %c0_239] : memref<64x128xf32, #tpu.memory_space<vmem>>, vector<64x128xf32>
    %cst_240 = arith.constant dense<0.000000e+00> : vector<128xf32>
    %308 = vector.multi_reduction <add>, %307, %cst_240 [0] : vector<64x128xf32> to vector<128xf32>
    %cst_241 = arith.constant 1.562500e-02 : f32
    %309 = vector.broadcast %cst_241 : f32 to vector<128xf32>
    %310 = arith.mulf %308, %309 : vector<128xf32>
    %311 = vector.shape_cast %310 : vector<128xf32> to vector<1x128xf32>
    %312 = vector.shape_cast %311 : vector<1x128xf32> to vector<1x128xf32>
    %313 = vector.broadcast %312 : vector<1x128xf32> to vector<8x128xf32>
    %c0_242 = arith.constant 0 : index
    %c0_243 = arith.constant 0 : index
    %314 = vector.load %arg6[%c0_242, %c0_243] : memref<128x128xf32, #tpu.memory_space<vmem>>, vector<128x128xf32>
    %cst_244 = arith.constant dense<0.000000e+00> : vector<8x128xf32>
    %315 = tpu.matmul %313, %314, %cst_244 {dimension_numbers = #tpu.dot_dimension_numbers<[1], [0], [0], [1], [0, 0, 1, 1], [], []>} : vector<8x128xf32>, vector<128x128xf32>, vector<8x128xf32> -> vector<8x128xf32>
    %cst_245 = arith.constant 0.000000e+00 : f32
    %316 = vector.broadcast %cst_245 : f32 to vector<8x128xf32>
    %317 = arith.maximumf %315, %316 : vector<8x128xf32>
    %c0_246 = arith.constant 0 : index
    %c0_247 = arith.constant 0 : index
    %318 = vector.load %arg7[%c0_246, %c0_247] : memref<128x128xf32, #tpu.memory_space<vmem>>, vector<128x128xf32>
    %cst_248 = arith.constant dense<0.000000e+00> : vector<8x128xf32>
    %319 = tpu.matmul %317, %318, %cst_248 {dimension_numbers = #tpu.dot_dimension_numbers<[1], [0], [0], [1], [0, 0, 1, 1], [], []>} : vector<8x128xf32>, vector<128x128xf32>, vector<8x128xf32> -> vector<8x128xf32>
    %cst_249 = arith.constant 3.000000e+00 : f32
    %320 = vector.broadcast %cst_249 : f32 to vector<8x128xf32>
    %321 = arith.addf %319, %320 : vector<8x128xf32>
    %cst_250 = arith.constant 0.000000e+00 : f32
    %cst_251 = arith.constant 6.000000e+00 : f32
    %322 = vector.broadcast %cst_250 : f32 to vector<8x128xf32>
    %323 = arith.maximumf %322, %321 : vector<8x128xf32>
    %324 = vector.broadcast %cst_251 : f32 to vector<8x128xf32>
    %325 = arith.minimumf %324, %323 : vector<8x128xf32>
    %cst_252 = arith.constant 0.166666672 : f32
    %326 = vector.broadcast %cst_252 : f32 to vector<8x128xf32>
    %327 = arith.mulf %325, %326 : vector<8x128xf32>
    %328 = vector.extract_strided_slice %327 {offsets = [0, 0], sizes = [1, 128], strides = [1, 1]} : vector<8x128xf32> to vector<1x128xf32>
    %329 = vector.shape_cast %328 : vector<1x128xf32> to vector<128xf32>
    %330 = vector.shape_cast %329 : vector<128xf32> to vector<1x128xf32>
    %331 = vector.broadcast %330 : vector<1x128xf32> to vector<64x128xf32>
    %332 = arith.mulf %306, %331 : vector<64x128xf32>
    %cst_253 = arith.constant 3.000000e+00 : f32
    %333 = vector.broadcast %cst_253 : f32 to vector<64x128xf32>
    %334 = arith.addf %332, %333 : vector<64x128xf32>
    %cst_254 = arith.constant 0.000000e+00 : f32
    %cst_255 = arith.constant 6.000000e+00 : f32
    %335 = vector.broadcast %cst_254 : f32 to vector<64x128xf32>
    %336 = arith.maximumf %335, %334 : vector<64x128xf32>
    %337 = vector.broadcast %cst_255 : f32 to vector<64x128xf32>
    %338 = arith.minimumf %337, %336 : vector<64x128xf32>
    %339 = arith.mulf %332, %338 : vector<64x128xf32>
    %cst_256 = arith.constant 0.166666672 : f32
    %340 = vector.broadcast %cst_256 : f32 to vector<64x128xf32>
    %341 = arith.mulf %339, %340 : vector<64x128xf32>
    %342 = arith.truncf %341 : vector<64x128xf32> to vector<64x128xbf16>
    %c0_257 = arith.constant 0 : index
    %c0_258 = arith.constant 0 : index
    %343 = vector.load %arg8[%c0_257, %c0_258] : memref<128x40xbf16, #tpu.memory_space<vmem>>, vector<128x40xbf16>
    %cst_259 = arith.constant dense<0.000000e+00> : vector<64x40xf32>
    %344 = tpu.matmul %342, %343, %cst_259 {dimension_numbers = #tpu.dot_dimension_numbers<[1], [0], [0], [1], [0, 0, 1, 1], [], []>} : vector<64x128xbf16>, vector<128x40xbf16>, vector<64x40xf32> -> vector<64x40xf32>
    %c0_260 = arith.constant 0 : index
    %c0_261 = arith.constant 0 : index
    %345 = vector.load %arg9[%c0_260, %c0_261] : memref<1x40xf32, #tpu.memory_space<vmem>>, vector<1x40xf32>
    %346 = vector.broadcast %345 : vector<1x40xf32> to vector<64x40xf32>
    %347 = arith.addf %344, %346 : vector<64x40xf32>
    %c0_262 = arith.constant 0 : index
    %c0_263 = arith.constant 0 : index
    %c0_264 = arith.constant 0 : index
    %348 = vector.load %arg10[%c0_262, %c0_263, %c0_264] : memref<1x64x40xf32, #tpu.memory_space<vmem>>, vector<1x64x40xf32>
    %349 = vector.shape_cast %348 : vector<1x64x40xf32> to vector<64x40xf32>
    %350 = vector.shape_cast %347 : vector<64x40xf32> to vector<1x64x40xf32>
    tpu.vector_store %arg10[%c0_262, %c0_263, %c0_264], %350 {strides = array<i32>} : memref<1x64x40xf32, #tpu.memory_space<vmem>>, vector<1x64x40xf32>,
    return
  }
  func.func @transform_0(%arg0: i32) -> (i32, i32, i32) {
    %c0_i32 = arith.constant 0 : i32
    %c0_i32_0 = arith.constant 0 : i32
    %c0_i32_1 = arith.constant 0 : i32
    return %arg0, %c0_i32, %c0_i32_0 : i32, i32, i32
  }
  func.func @transform_1(%arg0: i32) -> (i32, i32) {
    %c0_i32 = arith.constant 0 : i32
    %c0_i32_0 = arith.constant 0 : i32
    %c0_i32_1 = arith.constant 0 : i32
    return %c0_i32, %c0_i32_0 : i32, i32
  }
  func.func @transform_2(%arg0: i32) -> (i32, i32) {
    %c0_i32 = arith.constant 0 : i32
    %c0_i32_0 = arith.constant 0 : i32
    %c0_i32_1 = arith.constant 0 : i32
    return %c0_i32, %c0_i32_0 : i32, i32
  }
  func.func @transform_3(%arg0: i32) -> (i32, i32) {
    %c0_i32 = arith.constant 0 : i32
    %c0_i32_0 = arith.constant 0 : i32
    %c0_i32_1 = arith.constant 0 : i32
    return %c0_i32, %c0_i32_0 : i32, i32
  }
  func.func @transform_4(%arg0: i32) -> (i32, i32) {
    %c0_i32 = arith.constant 0 : i32
    %c0_i32_0 = arith.constant 0 : i32
    %c0_i32_1 = arith.constant 0 : i32
    return %c0_i32, %c0_i32_0 : i32, i32
  }
  func.func @transform_5(%arg0: i32) -> (i32, i32) {
    %c0_i32 = arith.constant 0 : i32
    %c0_i32_0 = arith.constant 0 : i32
    %c0_i32_1 = arith.constant 0 : i32
    return %c0_i32, %c0_i32_0 : i32, i32
  }
  func.func @transform_6(%arg0: i32) -> (i32, i32) {
    %c0_i32 = arith.constant 0 : i32
    %c0_i32_0 = arith.constant 0 : i32
    %c0_i32_1 = arith.constant 0 : i32
    return %c0_i32, %c0_i32_0 : i32, i32
  }
  func.func @transform_7(%arg0: i32) -> (i32, i32) {
    %c0_i32 = arith.constant 0 : i32
    %c0_i32_0 = arith.constant 0 : i32
    %c0_i32_1 = arith.constant 0 : i32
    return %c0_i32, %c0_i32_0 : i32, i32
  }
  func.func @transform_8(%arg0: i32) -> (i32, i32) {
    %c0_i32 = arith.constant 0 : i32
    %c0_i32_0 = arith.constant 0 : i32
    %c0_i32_1 = arith.constant 0 : i32
    return %c0_i32, %c0_i32_0 : i32, i32
  }
  func.func @transform_9(%arg0: i32) -> (i32, i32, i32) {
    %c0_i32 = arith.constant 0 : i32
    %c0_i32_0 = arith.constant 0 : i32
    %c0_i32_1 = arith.constant 0 : i32
    return %arg0, %c0_i32, %c0_i32_0 : i32, i32, i32
  }
}

</mosaic_0001>

<llo_original>
// kernel: mobile_bottleneck_forward.1
$region0: #{mobile_bottleneck_forward.1}
  #allocation0 [shape = 'u32[]', space=smem, size = 0x4, offset = 0x4, fixed_abs, tag = 'smem constant byte address 0x4 - core index']
  #allocation1 [shape = 'u32[72,128]{1,0:T(1,128)}', space=vmem, size = 0x9000, scoped, tag = 'internal scratch']
  #allocation2 [shape = 'f32[4,10,10,128]{3,2,1,0:T(8,128)}', space=vmem, size = 0x50000, scoped, tag = 'scratch operand']
  #allocation3 [shape = 'f32[64,128]{1,0:T(8,128)}', space=vmem, size = 0x8000, scoped, tag = 'scratch operand']
  %s0 = inlined_call_operand.vmem [shape: bf16[2,256,16], index: 0, kind: input, shape index: {}]
  %s1 = inlined_call_operand.vmem [shape: bf16[16,128], index: 1, kind: input, shape index: {}]
  %s2 = inlined_call_operand.vmem [shape: f32[1,128], index: 2, kind: input, shape index: {}]
  %s3 = inlined_call_operand.vmem [shape: f32[25,128], index: 3, kind: input, shape index: {}]
  %s4 = inlined_call_operand.vmem [shape: f32[1,128], index: 4, kind: input, shape index: {}]
  %s5 = inlined_call_operand.vmem [shape: f32[128,128], index: 5, kind: input, shape index: {}]
  %s6 = inlined_call_operand.vmem [shape: f32[128,128], index: 6, kind: input, shape index: {}]
  %s7 = inlined_call_operand.vmem [shape: bf16[128,40], index: 7, kind: input, shape index: {}]
  %s8 = inlined_call_operand.vmem [shape: f32[1,40], index: 8, kind: input, shape index: {}]
  %s9 = inlined_call_operand.hbm [shape: f32[2,64,40], index: 9, kind: output, shape index: {}]
  %s10 = sld [smem:[#allocation0]]
  $region69: #{mobile_bottleneck_forward.1} parent=0
    _
  %s12 = ssub.s32 1, %s10
  %s13 = scalar_select 0, %s12, %s10
  $region1: #{mobile_bottleneck_forward.1} parent=0
    #allocation4 [shape = 'u8[65536]{0}', space=vmem, size = 0x10000, scoped, tag = 'output window, operand 0']
    #allocation5 [shape = 's32[2]{0}', space=sflag, size = 0x8, scoped, tag = 'scoped memory for mobile_bottleneck_forward.1']
    %14 = vsyncpa [#allocation5], 0
    %s15 = scalar_lea.sflag [#allocation5], 1
    %16 = vsyncpa %s15, 0
    loop: start=0, step=1, limit=4
    $region2: #{mobile_bottleneck_forward.1} parent=1 // loop_pre_header
      _
    $region3: #{mobile_bottleneck_forward.1} parent=1 // loop_header
      %s18 = sphi 0, %s22
      %p19 = scmp.ge.s32.totalorder %s18, 4
      %s28 = sphi 0, %s30
      %s31 = sphi 0, %s28
      %s32 = sphi 0, %s31
      %s48 = sphi 0, %s32
      %s52 = sphi 0, %s52
      %s54 = sphi 0, %s52
      %s55 = sphi 0, %s54
      %s69 = sphi 0, %s55
      %s73 = sphi 0, %s73
      %s75 = sphi 0, %s73
      %s76 = sphi 0, %s75
      %s90 = sphi 0, %s76
      %s94 = sphi 0, %s94
      %s96 = sphi 0, %s94
      %s97 = sphi 0, %s96
      %s111 = sphi 0, %s97
      %s115 = sphi 0, %s115
      %s117 = sphi 0, %s115
      %s118 = sphi 0, %s117
      %s132 = sphi 0, %s118
      %s136 = sphi 0, %s136
      %s138 = sphi 0, %s136
      %s139 = sphi 0, %s138
      %s153 = sphi 0, %s139
      %s157 = sphi 0, %s157
      %s159 = sphi 0, %s157
      %s160 = sphi 0, %s159
      %s174 = sphi 0, %s160
      %s178 = sphi 0, %s178
      %s180 = sphi 0, %s178
      %s181 = sphi 0, %s180
      %s195 = sphi 0, %s181
      %s199 = sphi 0, %s199
      %s201 = sphi 0, %s199
      %s202 = sphi 0, %s201
      %s216 = sphi 0, %s202
      %s222 = sphi 0, %s224
      %s225 = sphi 0, %s222
      %s226 = sphi 0, %s225
      %s242 = sphi 0, %s226
    $region4: #{mobile_bottleneck_forward.1} parent=1 // loop_header_branch
      %21 = sbr.rel (%p19) target = $region8
    $region5: #{mobile_bottleneck_forward.1} parent=1 // loop_body
      %s23 = ssub.s32 %s18, 1
      %s24 = ssub.s32 %s18, 2
      %s25 = sadd.s32 %s18, 1
      %s26 = ssub.s32 %s18, %s25
      %p27 = scmp.eq.s32.totalorder %s26, 0
      %s29 = sadd.s32 %s28, 1
      %s30 = scalar_select %p27, %s28, %s29
      %p33 = pneg %p27
      %p34 = scmp.eq.s32.totalorder %s18, 1
      %p35 = por %p33, %p34
      %p36 = scmp.ne.s32.totalorder %s28, %s31
      %p37 = scmp.eq.s32.totalorder %s18, 0
      %p38 = por %p36, %p37
      %p39 = scmp.ne.s32.totalorder %s28, %s31
      %p40 = scmp.eq.s32.totalorder %s23, 1
      %p41 = por %p39, %p40
      %p42 = scmp.ne.s32.totalorder %s31, %s32
      %p43 = scmp.eq.s32.totalorder %s23, 0
      %p44 = por %p42, %p43
      %p45 = scmp.ne.s32.totalorder %s31, %s32
      %p46 = scmp.eq.s32.totalorder %s24, 1
      %p47 = por %p45, %p46
      %p49 = scmp.ne.s32.totalorder %s32, %s48
      %p50 = scmp.eq.s32.totalorder %s24, 0
      %p51 = por %p49, %p50
      %s53 = sadd.s32 %s52, 1
      %p56 = scmp.eq.s32.totalorder %s18, 1
      %p57 = scmp.ne.s32.totalorder %s52, %s54
      %p58 = scmp.eq.s32.totalorder %s18, 0
      %p59 = por %p57, %p58
      %p60 = scmp.ne.s32.totalorder %s52, %s54
      %p61 = scmp.eq.s32.totalorder %s23, 1
      %p62 = por %p60, %p61
      %p63 = scmp.ne.s32.totalorder %s54, %s55
      %p64 = scmp.eq.s32.totalorder %s23, 0
      %p65 = por %p63, %p64
      %p66 = scmp.ne.s32.totalorder %s54, %s55
      %p67 = scmp.eq.s32.totalorder %s24, 1
      %p68 = por %p66, %p67
      %p70 = scmp.ne.s32.totalorder %s55, %s69
      %p71 = scmp.eq.s32.totalorder %s24, 0
      %p72 = por %p70, %p71
      %s74 = sadd.s32 %s73, 1
      %p77 = scmp.eq.s32.totalorder %s18, 1
      %p78 = scmp.ne.s32.totalorder %s73, %s75
      %p79 = scmp.eq.s32.totalorder %s18, 0
      %p80 = por %p78, %p79
      %p81 = scmp.ne.s32.totalorder %s73, %s75
      %p82 = scmp.eq.s32.totalorder %s23, 1
      %p83 = por %p81, %p82
      %p84 = scmp.ne.s32.totalorder %s75, %s76
      %p85 = scmp.eq.s32.totalorder %s23, 0
      %p86 = por %p84, %p85
      %p87 = scmp.ne.s32.totalorder %s75, %s76
      %p88 = scmp.eq.s32.totalorder %s24, 1
      %p89 = por %p87, %p88
      %p91 = scmp.ne.s32.totalorder %s76, %s90
      %p92 = scmp.eq.s32.totalorder %s24, 0
      %p93 = por %p91, %p92
      %s95 = sadd.s32 %s94, 1
      %p98 = scmp.eq.s32.totalorder %s18, 1
      %p99 = scmp.ne.s32.totalorder %s94, %s96
      %p100 = scmp.eq.s32.totalorder %s18, 0
      %p101 = por %p99, %p100
      %p102 = scmp.ne.s32.totalorder %s94, %s96
      %p103 = scmp.eq.s32.totalorder %s23, 1
      %p104 = por %p102, %p103
      %p105 = scmp.ne.s32.totalorder %s96, %s97
      %p106 = scmp.eq.s32.totalorder %s23, 0
      %p107 = por %p105, %p106
      %p108 = scmp.ne.s32.totalorder %s96, %s97
      %p109 = scmp.eq.s32.totalorder %s24, 1
      %p110 = por %p108, %p109
      %p112 = scmp.ne.s32.totalorder %s97, %s111
      %p113 = scmp.eq.s32.totalorder %s24, 0
      %p114 = por %p112, %p113
      %s116 = sadd.s32 %s115, 1
      %p119 = scmp.eq.s32.totalorder %s18, 1
      %p120 = scmp.ne.s32.totalorder %s115, %s117
      %p121 = scmp.eq.s32.totalorder %s18, 0
      %p122 = por %p120, %p121
      %p123 = scmp.ne.s32.totalorder %s115, %s117
      %p124 = scmp.eq.s32.totalorder %s23, 1
      %p125 = por %p123, %p124
      %p126 = scmp.ne.s32.totalorder %s117, %s118
      %p127 = scmp.eq.s32.totalorder %s23, 0
      %p128 = por %p126, %p127
      %p129 = scmp.ne.s32.totalorder %s117, %s118
      %p130 = scmp.eq.s32.totalorder %s24, 1
      %p131 = por %p129, %p130
      %p133 = scmp.ne.s32.totalorder %s118, %s132
      %p134 = scmp.eq.s32.totalorder %s24, 0
      %p135 = por %p133, %p134
      %s137 = sadd.s32 %s136, 1
      %p140 = scmp.eq.s32.totalorder %s18, 1
      %p141 = scmp.ne.s32.totalorder %s136, %s138
      %p142 = scmp.eq.s32.totalorder %s18, 0
      %p143 = por %p141, %p142
      %p144 = scmp.ne.s32.totalorder %s136, %s138
      %p145 = scmp.eq.s32.totalorder %s23, 1
      %p146 = por %p144, %p145
      %p147 = scmp.ne.s32.totalorder %s138, %s139
      %p148 = scmp.eq.s32.totalorder %s23, 0
      %p149 = por %p147, %p148
      %p150 = scmp.ne.s32.totalorder %s138, %s139
      %p151 = scmp.eq.s32.totalorder %s24, 1
      %p152 = por %p150, %p151
      %p154 = scmp.ne.s32.totalorder %s139, %s153
      %p155 = scmp.eq.s32.totalorder %s24, 0
      %p156 = por %p154, %p155
      %s158 = sadd.s32 %s157, 1
      %p161 = scmp.eq.s32.totalorder %s18, 1
      %p162 = scmp.ne.s32.totalorder %s157, %s159
      %p163 = scmp.eq.s32.totalorder %s18, 0
      %p164 = por %p162, %p163
      %p165 = scmp.ne.s32.totalorder %s157, %s159
      %p166 = scmp.eq.s32.totalorder %s23, 1
      %p167 = por %p165, %p166
      %p168 = scmp.ne.s32.totalorder %s159, %s160
      %p169 = scmp.eq.s32.totalorder %s23, 0
      %p170 = por %p168, %p169
      %p171 = scmp.ne.s32.totalorder %s159, %s160
      %p172 = scmp.eq.s32.totalorder %s24, 1
      %p173 = por %p171, %p172
      %p175 = scmp.ne.s32.totalorder %s160, %s174
      %p176 = scmp.eq.s32.totalorder %s24, 0
      %p177 = por %p175, %p176
      %s179 = sadd.s32 %s178, 1
      %p182 = scmp.eq.s32.totalorder %s18, 1
      %p183 = scmp.ne.s32.totalorder %s178, %s180
      %p184 = scmp.eq.s32.totalorder %s18, 0
      %p185 = por %p183, %p184
      %p186 = scmp.ne.s32.totalorder %s178, %s180
      %p187 = scmp.eq.s32.totalorder %s23, 1
      %p188 = por %p186, %p187
      %p189 = scmp.ne.s32.totalorder %s180, %s181
      %p190 = scmp.eq.s32.totalorder %s23, 0
      %p191 = por %p189, %p190
      %p192 = scmp.ne.s32.totalorder %s180, %s181
      %p193 = scmp.eq.s32.totalorder %s24, 1
      %p194 = por %p192, %p193
      %p196 = scmp.ne.s32.totalorder %s181, %s195
      %p197 = scmp.eq.s32.totalorder %s24, 0
      %p198 = por %p196, %p197
      %s200 = sadd.s32 %s199, 1
      %p203 = scmp.eq.s32.totalorder %s18, 1
      %p204 = scmp.ne.s32.totalorder %s199, %s201
      %p205 = scmp.eq.s32.totalorder %s18, 0
      %p206 = por %p204, %p205
      %p207 = scmp.ne.s32.totalorder %s199, %s201
      %p208 = scmp.eq.s32.totalorder %s23, 1
      %p209 = por %p207, %p208
      %p210 = scmp.ne.s32.totalorder %s201, %s202
      %p211 = scmp.eq.s32.totalorder %s23, 0
      %p212 = por %p210, %p211
      %p213 = scmp.ne.s32.totalorder %s201, %s202
      %p214 = scmp.eq.s32.totalorder %s24, 1
      %p215 = por %p213, %p214
      %p217 = scmp.ne.s32.totalorder %s202, %s216
      %p218 = scmp.eq.s32.totalorder %s24, 0
      %p219 = por %p217, %p218
      %s220 = ssub.s32 %s18, %s25
      %p221 = scmp.eq.s32.totalorder %s220, 0
      %s223 = sadd.s32 %s222, 1
      %s224 = scalar_select %p221, %s222, %s223
      %p227 = pneg %p221
      %p228 = scmp.eq.s32.totalorder %s18, 1
      %p229 = por %p227, %p228
      %p230 = scmp.ne.s32.totalorder %s222, %s225
      %p231 = scmp.eq.s32.totalorder %s18, 0
      %p232 = por %p230, %p231
      %p233 = scmp.ne.s32.totalorder %s222, %s225
      %p234 = scmp.eq.s32.totalorder %s23, 1
      %p235 = por %p233, %p234
      %p236 = scmp.ne.s32.totalorder %s225, %s226
      %p237 = scmp.eq.s32.totalorder %s23, 0
      %p238 = por %p236, %p237
      %p239 = scmp.ne.s32.totalorder %s225, %s226
      %p240 = scmp.eq.s32.totalorder %s24, 1
      %p241 = por %p239, %p240
      %p243 = scmp.ne.s32.totalorder %s226, %s242
      %p244 = scmp.eq.s32.totalorder %s24, 0
      %p245 = por %p243, %p244
      %p246 = scmp.le.s32.totalorder 1, %s18
      %p247 = scmp.lt.s32.totalorder %s18, 3
      %p248 = pnand %p246, %p247
      %p249 = pneg %p248
      // Predicated region
      $region9: #{mobile_bottleneck_forward.1} parent=5 // pred_check
        _
      $region10: #{mobile_bottleneck_forward.1} parent=5 // pred_check_branch
        %251 = sbr.rel (%p248) target = $region12
      $region11: #{mobile_bottleneck_forward.1} parent=5 // pred_region
        %s252 = ssub.s32 %s18, 1
        // Predicated region
        $region13: #{mobile_bottleneck_forward.1} parent=11 // pred_check
          %p253 = pneg %p65
        $region14: #{mobile_bottleneck_forward.1} parent=11 // pred_check_branch
          %255 = sbr.rel (%p253) target = $region16
        $region15: #{mobile_bottleneck_forward.1} parent=11 // pred_region
          _
        $region16: #{mobile_bottleneck_forward.1} parent=11 // pred_fallthru
          _
        // Predicated region
        $region17: #{mobile_bottleneck_forward.1} parent=11 // pred_check
          %p256 = pneg %p86
        $region18: #{mobile_bottleneck_forward.1} parent=11 // pred_check_branch
          %258 = sbr.rel (%p256) target = $region20
        $region19: #{mobile_bottleneck_forward.1} parent=11 // pred_region
          _
        $region20: #{mobile_bottleneck_forward.1} parent=11 // pred_fallthru
          _
        // Predicated region
        $region21: #{mobile_bottleneck_forward.1} parent=11 // pred_check
          %p259 = pneg %p107
        $region22: #{mobile_bottleneck_forward.1} parent=11 // pred_check_branch
          %261 = sbr.rel (%p259) target = $region24
        $region23: #{mobile_bottleneck_forward.1} parent=11 // pred_region
          _
        $region24: #{mobile_bottleneck_forward.1} parent=11 // pred_fallthru
          _
        // Predicated region
        $region25: #{mobile_bottleneck_forward.1} parent=11 // pred_check
          %p262 = pneg %p128
        $region26: #{mobile_bottleneck_forward.1} parent=11 // pred_check_branch
          %264 = sbr.rel (%p262) target = $region28
        $region27: #{mobile_bottleneck_forward.1} parent=11 // pred_region
          _
        $region28: #{mobile_bottleneck_forward.1} parent=11 // pred_fallthru
          _
        // Predicated region
        $region29: #{mobile_bottleneck_forward.1} parent=11 // pred_check
          %p265 = pneg %p149
        $region30: #{mobile_bottleneck_forward.1} parent=11 // pred_check_branch
          %267 = sbr.rel (%p265) target = $region32
        $region31: #{mobile_bottleneck_forward.1} parent=11 // pred_region
          _
        $region32: #{mobile_bottleneck_forward.1} parent=11 // pred_fallthru
          _
        // Predicated region
        $region33: #{mobile_bottleneck_forward.1} parent=11 // pred_check
          %p268 = pneg %p170
        $region34: #{mobile_bottleneck_forward.1} parent=11 // pred_check_branch
          %270 = sbr.rel (%p268) target = $region36
        $region35: #{mobile_bottleneck_forward.1} parent=11 // pred_region
          _
        $region36: #{mobile_bottleneck_forward.1} parent=11 // pred_fallthru
          _
        // Predicated region
        $region37: #{mobile_bottleneck_forward.1} parent=11 // pred_check
          %p271 = pneg %p191
        $region38: #{mobile_bottleneck_forward.1} parent=11 // pred_check_branch
          %273 = sbr.rel (%p271) target = $region40
        $region39: #{mobile_bottleneck_forward.1} parent=11 // pred_region
          _
        $region40: #{mobile_bottleneck_forward.1} parent=11 // pred_fallthru
          _
        // Predicated region
        $region41: #{mobile_bottleneck_forward.1} parent=11 // pred_check
          %p274 = pneg %p212
        $region42: #{mobile_bottleneck_forward.1} parent=11 // pred_check_branch
          %276 = sbr.rel (%p274) target = $region44
        $region43: #{mobile_bottleneck_forward.1} parent=11 // pred_region
          _
        $region44: #{mobile_bottleneck_forward.1} parent=11 // pred_fallthru
          _
      $region12: #{mobile_bottleneck_forward.1} parent=5 // pred_fallthru
        _
      %p277 = scmp.lt.s32.totalorder %s18, 2
      // Predicated region
      $region45: #{mobile_bottleneck_forward.1} parent=5 // pred_check
        %p278 = pneg %p277
      $region46: #{mobile_bottleneck_forward.1} parent=5 // pred_check_branch
        %280 = sbr.rel (%p278) target = $region48
      $region47: #{mobile_bottleneck_forward.1} parent=5 // pred_region
        // Predicated region
        $region49: #{mobile_bottleneck_forward.1} parent=47 // pred_check
          %p281 = pneg %p38
        $region50: #{mobile_bottleneck_forward.1} parent=47 // pred_check_branch
          %283 = sbr.rel (%p281) target = $region52
        $region51: #{mobile_bottleneck_forward.1} parent=47 // pred_region
          %p284 = scmp.lt.s32.totalorder %s18, 1
          %s285 = scalar_select %p284, %s18, 1
          %s286 = smul.addr %s285, 32
          %s287 = smul.addr %s286, 4
          %s288 = scalar_lea.vmem %s0, %s287
        $region52: #{mobile_bottleneck_forward.1} parent=47 // pred_fallthru
          _
      $region48: #{mobile_bottleneck_forward.1} parent=5 // pred_fallthru
        _
      %p289 = scmp.le.s32.totalorder 1, %s18
      %p290 = scmp.lt.s32.totalorder %s18, 3
      %p291 = pnand %p289, %p290
      %p292 = pneg %p291
      // Predicated region
      $region53: #{mobile_bottleneck_forward.1} parent=5 // pred_check
        _
      $region54: #{mobile_bottleneck_forward.1} parent=5 // pred_check_branch
        %294 = sbr.rel (%p291) target = $region56
      $region55: #{mobile_bottleneck_forward.1} parent=5 // pred_region
        %s295 = ssub.s32 %s18, 1
        %p296 = scmp.lt.s32.totalorder %s23, 1
        %s297 = scalar_select %p296, %s23, 1
        %s298 = smul.addr %s297, 32
        %s299 = smul.addr %s298, 4
        %s300 = scalar_lea.vmem %s0, %s299
        %p301 = pneg %p44
        %p302 = pneg %p41
        %p303 = pneg %p65
        %p304 = pneg %p62
        %p305 = pneg %p86
        %p306 = pneg %p83
        %p307 = pneg %p107
        %p308 = pneg %p104
        %p309 = pneg %p128
        %p310 = pneg %p125
        %p311 = pneg %p149
        %p312 = pneg %p146
        %p313 = pneg %p170
        %p314 = pneg %p167
        %p315 = pneg %p191
        %p316 = pneg %p188
        %p317 = pneg %p212
        %p318 = pneg %p209
        %p319 = pneg %p238
        %p320 = pneg %p235
        %s321 = sand.u32 %s225, 1
        %s322 = scalar_lea.sflag [#allocation5], %s321
        %s323 = sand.u32 %s225, 1
        %s324 = smul.addr %s323, 64
        %s325 = scalar_lea.vmem [#allocation4], %s324
        %p326 = scmp.lt.s32.totalorder %s23, 1
        %s327 = scalar_select %p326, %s23, 1
        %s328 = smul.addr %s327, 32
        %s329 = smul.addr %s328, 4
        %s330 = scalar_lea.vmem %s0, %s329
        %332 = vst [vmem:[#allocation2] sm:$0xff] 0.0
        %333 = vst [vmem:[#allocation2 + $0x8] sm:$0x3] 0.0
        %s334 = scalar_lea.vmem [#allocation2], 144
        %335 = vst [vmem:[%s334] sm:$0xff] 0.0
        %336 = vst [vmem:[%s334 + $0x8] sm:$0x3] 0.0
        %s337 = scalar_lea.vmem [#allocation2], 16
        %338 = vst [vmem:[%s337] sm:$0x1] 0.0
        %339 = vst [vmem:[%s337 + $0x10] sm:$0x1] 0.0
        %340 = vst [vmem:[%s337 + $0x20] sm:$0x1] 0.0
        %341 = vst [vmem:[%s337 + $0x30] sm:$0x1] 0.0
        %342 = vst [vmem:[%s337 + $0x40] sm:$0x1] 0.0
        %343 = vst [vmem:[%s337 + $0x50] sm:$0x1] 0.0
        %344 = vst [vmem:[%s337 + $0x60] sm:$0x1] 0.0
        %345 = vst [vmem:[%s337 + $0x70] sm:$0x1] 0.0
        %346 = vst [vmem:[%s337 + $0x9] sm:$0x1] 0.0
        %347 = vst [vmem:[%s337 + $0x19] sm:$0x1] 0.0
        %348 = vst [vmem:[%s337 + $0x29] sm:$0x1] 0.0
        %349 = vst [vmem:[%s337 + $0x39] sm:$0x1] 0.0
        %350 = vst [vmem:[%s337 + $0x49] sm:$0x1] 0.0
        %351 = vst [vmem:[%s337 + $0x59] sm:$0x1] 0.0
        %352 = vst [vmem:[%s337 + $0x69] sm:$0x1] 0.0
        %353 = vst [vmem:[%s337 + $0x79] sm:$0x1] 0.0
        %s354 = scalar_lea.vmem [#allocation2], 160
        %355 = vst [vmem:[%s354] sm:$0xff] 0.0
        %356 = vst [vmem:[%s354 + $0x8] sm:$0x3] 0.0
        %s357 = scalar_lea.vmem [#allocation2], 304
        %358 = vst [vmem:[%s357] sm:$0xff] 0.0
        %359 = vst [vmem:[%s357 + $0x8] sm:$0x3] 0.0
        %s360 = scalar_lea.vmem [#allocation2], 176
        %361 = vst [vmem:[%s360] sm:$0x1] 0.0
        %362 = vst [vmem:[%s360 + $0x10] sm:$0x1] 0.0
        %363 = vst [vmem:[%s360 + $0x20] sm:$0x1] 0.0
        %364 = vst [vmem:[%s360 + $0x30] sm:$0x1] 0.0
        %365 = vst [vmem:[%s360 + $0x40] sm:$0x1] 0.0
        %366 = vst [vmem:[%s360 + $0x50] sm:$0x1] 0.0
        %367 = vst [vmem:[%s360 + $0x60] sm:$0x1] 0.0
        %368 = vst [vmem:[%s360 + $0x70] sm:$0x1] 0.0
        %369 = vst [vmem:[%s360 + $0x9] sm:$0x1] 0.0
        %370 = vst [vmem:[%s360 + $0x19] sm:$0x1] 0.0
        %371 = vst [vmem:[%s360 + $0x29] sm:$0x1] 0.0
        %372 = vst [vmem:[%s360 + $0x39] sm:$0x1] 0.0
        %373 = vst [vmem:[%s360 + $0x49] sm:$0x1] 0.0
        %374 = vst [vmem:[%s360 + $0x59] sm:$0x1] 0.0
        %375 = vst [vmem:[%s360 + $0x69] sm:$0x1] 0.0
        %376 = vst [vmem:[%s360 + $0x79] sm:$0x1] 0.0
        %s377 = scalar_lea.vmem [#allocation2], 320
        %378 = vst [vmem:[%s377] sm:$0xff] 0.0
        %379 = vst [vmem:[%s377 + $0x8] sm:$0x3] 0.0
        %s380 = scalar_lea.vmem [#allocation2], 464
        %381 = vst [vmem:[%s380] sm:$0xff] 0.0
        %382 = vst [vmem:[%s380 + $0x8] sm:$0x3] 0.0
        %s383 = scalar_lea.vmem [#allocation2], 336
        %384 = vst [vmem:[%s383] sm:$0x1] 0.0
        %385 = vst [vmem:[%s383 + $0x10] sm:$0x1] 0.0
        %386 = vst [vmem:[%s383 + $0x20] sm:$0x1] 0.0
        %387 = vst [vmem:[%s383 + $0x30] sm:$0x1] 0.0
        %388 = vst [vmem:[%s383 + $0x40] sm:$0x1] 0.0
        %389 = vst [vmem:[%s383 + $0x50] sm:$0x1] 0.0
        %390 = vst [vmem:[%s383 + $0x60] sm:$0x1] 0.0
        %391 = vst [vmem:[%s383 + $0x70] sm:$0x1] 0.0
        %392 = vst [vmem:[%s383 + $0x9] sm:$0x1] 0.0
        %393 = vst [vmem:[%s383 + $0x19] sm:$0x1] 0.0
        %394 = vst [vmem:[%s383 + $0x29] sm:$0x1] 0.0
        %395 = vst [vmem:[%s383 + $0x39] sm:$0x1] 0.0
        %396 = vst [vmem:[%s383 + $0x49] sm:$0x1] 0.0
        %397 = vst [vmem:[%s383 + $0x59] sm:$0x1] 0.0
        %398 = vst [vmem:[%s383 + $0x69] sm:$0x1] 0.0
        %399 = vst [vmem:[%s383 + $0x79] sm:$0x1] 0.0
        %s400 = scalar_lea.vmem [#allocation2], 480
        %401 = vst [vmem:[%s400] sm:$0xff] 0.0
        %402 = vst [vmem:[%s400 + $0x8] sm:$0x3] 0.0
        %s403 = scalar_lea.vmem [#allocation2], 624
        %404 = vst [vmem:[%s403] sm:$0xff] 0.0
        %405 = vst [vmem:[%s403 + $0x8] sm:$0x3] 0.0
        %s406 = scalar_lea.vmem [#allocation2], 496
        %407 = vst [vmem:[%s406] sm:$0x1] 0.0
        %408 = vst [vmem:[%s406 + $0x10] sm:$0x1] 0.0
        %409 = vst [vmem:[%s406 + $0x20] sm:$0x1] 0.0
        %410 = vst [vmem:[%s406 + $0x30] sm:$0x1] 0.0
        %411 = vst [vmem:[%s406 + $0x40] sm:$0x1] 0.0
        %412 = vst [vmem:[%s406 + $0x50] sm:$0x1] 0.0
        %413 = vst [vmem:[%s406 + $0x60] sm:$0x1] 0.0
        %414 = vst [vmem:[%s406 + $0x70] sm:$0x1] 0.0
        %415 = vst [vmem:[%s406 + $0x9] sm:$0x1] 0.0
        %416 = vst [vmem:[%s406 + $0x19] sm:$0x1] 0.0
        %417 = vst [vmem:[%s406 + $0x29] sm:$0x1] 0.0
        %418 = vst [vmem:[%s406 + $0x39] sm:$0x1] 0.0
        %419 = vst [vmem:[%s406 + $0x49] sm:$0x1] 0.0
        %420 = vst [vmem:[%s406 + $0x59] sm:$0x1] 0.0
        %421 = vst [vmem:[%s406 + $0x69] sm:$0x1] 0.0
        %422 = vst [vmem:[%s406 + $0x79] sm:$0x1] 0.0
        %v423 = vld [vmem:[%s330] sm:$0xf]
        %v424 = vld [vmem:[%s330 + $0x4] sm:$0xf]
        %v425 = vld [vmem:[%s330 + $0x8] sm:$0xf]
        %v426 = vld [vmem:[%s330 + $0xc] sm:$0xf]
        %v427 = vld [vmem:[%s330 + $0x10] sm:$0xf]
        %v428 = vld [vmem:[%s330 + $0x14] sm:$0xf]
        %v429 = vld [vmem:[%s330 + $0x18] sm:$0xf]
        %v430 = vld [vmem:[%s330 + $0x1c] sm:$0xf]
        %v431 = vld [vmem:[%s330 + $0x20] sm:$0xf]
        %v432 = vld [vmem:[%s330 + $0x24] sm:$0xf]
        %v433 = vld [vmem:[%s330 + $0x28] sm:$0xf]
        %v434 = vld [vmem:[%s330 + $0x2c] sm:$0xf]
        %v435 = vld [vmem:[%s330 + $0x30] sm:$0xf]
        %v436 = vld [vmem:[%s330 + $0x34] sm:$0xf]
        %v437 = vld [vmem:[%s330 + $0x38] sm:$0xf]
        %v438 = vld [vmem:[%s330 + $0x3c] sm:$0xf]
        %v439 = vld [vmem:[%s330 + $0x40] sm:$0xf]
        %v440 = vld [vmem:[%s330 + $0x44] sm:$0xf]
        %v441 = vld [vmem:[%s330 + $0x48] sm:$0xf]
        %v442 = vld [vmem:[%s330 + $0x4c] sm:$0xf]
        %v443 = vld [vmem:[%s330 + $0x50] sm:$0xf]
        %v444 = vld [vmem:[%s330 + $0x54] sm:$0xf]
        %v445 = vld [vmem:[%s330 + $0x58] sm:$0xf]
        %v446 = vld [vmem:[%s330 + $0x5c] sm:$0xf]
        %v447 = vld [vmem:[%s330 + $0x60] sm:$0xf]
        %v448 = vld [vmem:[%s330 + $0x64] sm:$0xf]
        %v449 = vld [vmem:[%s330 + $0x68] sm:$0xf]
        %v450 = vld [vmem:[%s330 + $0x6c] sm:$0xf]
        %v451 = vld [vmem:[%s330 + $0x70] sm:$0xf]
        %v452 = vld [vmem:[%s330 + $0x74] sm:$0xf]
        %v453 = vld [vmem:[%s330 + $0x78] sm:$0xf]
        %v454 = vld [vmem:[%s330 + $0x7c] sm:$0xf]
        %v455 = vld [vmem:[%s1] sm:$0xf]
        %v456 = vld [vmem:[%s1 + $0x4] sm:$0xf]
        %v457 = vld [vmem:[%s2] sm:$0x1]
        %v459 = vperm.slane %v457, 0
        %v493 = vunpack.c.l.b16 %v423
        %v494 = vunpack.c.l.b16 %v424
        %v495 = vunpack.c.l.b16 %v425
        %v496 = vunpack.c.l.b16 %v426
        %v497 = vunpack.c.l.b16 %v427
        %v498 = vunpack.c.l.b16 %v428
        %v499 = vunpack.c.l.b16 %v429
        %v500 = vunpack.c.l.b16 %v430
        %v501 = vunpack.c.l.b16 %v431
        %v502 = vunpack.c.l.b16 %v432
        %v503 = vunpack.c.l.b16 %v433
        %v504 = vunpack.c.l.b16 %v434
        %v505 = vunpack.c.l.b16 %v435
        %v506 = vunpack.c.l.b16 %v436
        %v507 = vunpack.c.l.b16 %v437
        %v508 = vunpack.c.l.b16 %v438
        %v509 = vunpack.c.l.b16 %v439
        %v510 = vunpack.c.l.b16 %v440
        %v511 = vunpack.c.l.b16 %v441
        %v512 = vunpack.c.l.b16 %v442
        %v513 = vunpack.c.l.b16 %v443
        %v514 = vunpack.c.l.b16 %v444
        %v515 = vunpack.c.l.b16 %v445
        %v516 = vunpack.c.l.b16 %v446
        %v517 = vunpack.c.l.b16 %v447
        %v518 = vunpack.c.l.b16 %v448
        %v519 = vunpack.c.l.b16 %v449
        %v520 = vunpack.c.l.b16 %v450
        %v521 = vunpack.c.l.b16 %v451
        %v522 = vunpack.c.l.b16 %v452
        %v523 = vunpack.c.l.b16 %v453
        %v524 = vunpack.c.l.b16 %v454
        %v525 = vpack.c.b16 %v494, %v493
        %v526 = vpack.c.b16 %v496, %v495
        %v527 = vpack.c.b16 %v498, %v497
        %v528 = vpack.c.b16 %v500, %v499
        %v529 = vpack.c.b16 %v502, %v501
        %v530 = vpack.c.b16 %v504, %v503
        %v531 = vpack.c.b16 %v506, %v505
        %v532 = vpack.c.b16 %v508, %v507
        %v533 = vpack.c.b16 %v510, %v509
        %v534 = vpack.c.b16 %v512, %v511
        %v535 = vpack.c.b16 %v514, %v513
        %v536 = vpack.c.b16 %v516, %v515
        %v537 = vpack.c.b16 %v518, %v517
        %v538 = vpack.c.b16 %v520, %v519
        %v539 = vpack.c.b16 %v522, %v521
        %v540 = vpack.c.b16 %v524, %v523
        %v543 = vunpack.c.l.b16 %v455
        %v544 = vunpack.c.l.b16 %v456
        %v545 = vpack.c.b16 %v544, %v543
        %vm547 = vcmask 130048
        %v549 = vsel %vm547, %v525, 0
        %v552 = vsel %vm547, %v526, 0
        %v555 = vsel %vm547, %v527, 0
        %v558 = vsel %vm547, %v528, 0
        %v561 = vsel %vm547, %v529, 0
        %v564 = vsel %vm547, %v530, 0
        %v567 = vsel %vm547, %v531, 0
        %v570 = vsel %vm547, %v532, 0
        %v573 = vsel %vm547, %v533, 0
        %v576 = vsel %vm547, %v534, 0
        %v579 = vsel %vm547, %v535, 0
        %v582 = vsel %vm547, %v536, 0
        %v585 = vsel %vm547, %v537, 0
        %v588 = vsel %vm547, %v538, 0
        %v591 = vsel %vm547, %v539, 0
        %v594 = vsel %vm547, %v540, 0
        %596 = vmatpush.bf16.msra.mxu0 0
        %597 = vmatpush.bf16.msra.mxu0 0
        %598 = vmatpush.bf16.msra.mxu0 0
        %599 = vmatpush.bf16.msra.mxu0 0
        %600 = vmatpush.bf16.msra.mxu0 0
        %601 = vmatpush.bf16.msra.mxu0 0
        %602 = vmatpush.bf16.msra.mxu0 0
        %603 = vmatpush.bf16.msra.mxu0 %v545
        %604 = vmatmul.bf16.gmra.mxu0 %v549
        %v605 = vpop.f32.mrf.mxu0
        %v606 = vadd.f32 %v459, %v605
        %v607 = vpop.f32.mrf.mxu0
        %v608 = vadd.f32 %v459, %v607
        %609 = vmatmul.bf16.gmra.mxu0 %v552
        %v610 = vpop.f32.mrf.mxu0
        %v611 = vadd.f32 %v459, %v610
        %v612 = vpop.f32.mrf.mxu0
        %v613 = vadd.f32 %v459, %v612
        %614 = vmatmul.bf16.gmra.mxu0 %v555
        %v615 = vpop.f32.mrf.mxu0
        %v616 = vadd.f32 %v459, %v615
        %v617 = vpop.f32.mrf.mxu0
        %v618 = vadd.f32 %v459, %v617
        %619 = vmatmul.bf16.gmra.mxu0 %v558
        %v620 = vpop.f32.mrf.mxu0
        %v621 = vadd.f32 %v459, %v620
        %v622 = vpop.f32.mrf.mxu0
        %v623 = vadd.f32 %v459, %v622
        %624 = vmatmul.bf16.gmra.mxu0 %v561
        %v625 = vpop.f32.mrf.mxu0
        %v626 = vadd.f32 %v459, %v625
        %v627 = vpop.f32.mrf.mxu0
        %v628 = vadd.f32 %v459, %v627
        %629 = vmatmul.bf16.gmra.mxu0 %v564
        %v630 = vpop.f32.mrf.mxu0
        %v631 = vadd.f32 %v459, %v630
        %v632 = vpop.f32.mrf.mxu0
        %v633 = vadd.f32 %v459, %v632
        %634 = vmatmul.bf16.gmra.mxu0 %v567
        %v635 = vpop.f32.mrf.mxu0
        %v636 = vadd.f32 %v459, %v635
        %v637 = vpop.f32.mrf.mxu0
        %v638 = vadd.f32 %v459, %v637
        %639 = vmatmul.bf16.gmra.mxu0 %v570
        %v640 = vpop.f32.mrf.mxu0
        %v641 = vadd.f32 %v459, %v640
        %v642 = vpop.f32.mrf.mxu0
        %v643 = vadd.f32 %v459, %v642
        %644 = vmatmul.bf16.gmra.mxu0 %v573
        %v645 = vpop.f32.mrf.mxu0
        %v646 = vadd.f32 %v459, %v645
        %v647 = vpop.f32.mrf.mxu0
        %v648 = vadd.f32 %v459, %v647
        %649 = vmatmul.bf16.gmra.mxu0 %v576
        %v650 = vpop.f32.mrf.mxu0
        %v651 = vadd.f32 %v459, %v650
        %v652 = vpop.f32.mrf.mxu0
        %v653 = vadd.f32 %v459, %v652
        %654 = vmatmul.bf16.gmra.mxu0 %v579
        %v655 = vpop.f32.mrf.mxu0
        %v656 = vadd.f32 %v459, %v655
        %v657 = vpop.f32.mrf.mxu0
        %v658 = vadd.f32 %v459, %v657
        %659 = vmatmul.bf16.gmra.mxu0 %v582
        %v660 = vpop.f32.mrf.mxu0
        %v661 = vadd.f32 %v459, %v660
        %v662 = vpop.f32.mrf.mxu0
        %v663 = vadd.f32 %v459, %v662
        %664 = vmatmul.bf16.gmra.mxu0 %v585
        %v665 = vpop.f32.mrf.mxu0
        %v666 = vadd.f32 %v459, %v665
        %v667 = vpop.f32.mrf.mxu0
        %v668 = vadd.f32 %v459, %v667
        %669 = vmatmul.bf16.gmra.mxu0 %v588
        %v670 = vpop.f32.mrf.mxu0
        %v671 = vadd.f32 %v459, %v670
        %v672 = vpop.f32.mrf.mxu0
        %v673 = vadd.f32 %v459, %v672
        %674 = vmatmul.bf16.gmra.mxu0 %v591
        %v675 = vpop.f32.mrf.mxu0
        %v676 = vadd.f32 %v459, %v675
        %v677 = vpop.f32.mrf.mxu0
        %v678 = vadd.f32 %v459, %v677
        %679 = vmatmul.bf16.gmra.mxu0 %v594
        %v680 = vpop.f32.mrf.mxu0
        %v681 = vadd.f32 %v459, %v680
        %v682 = vpop.f32.mrf.mxu0
        %v683 = vadd.f32 %v459, %v682
        %684 = vdwg.mxu0
        %v685 = vadd.f32 %v606, 3.0
        %v686 = vadd.f32 %v608, 3.0
        %v687 = vadd.f32 %v611, 3.0
        %v688 = vadd.f32 %v613, 3.0
        %v689 = vadd.f32 %v616, 3.0
        %v690 = vadd.f32 %v618, 3.0
        %v691 = vadd.f32 %v621, 3.0
        %v692 = vadd.f32 %v623, 3.0
        %v693 = vadd.f32 %v626, 3.0
        %v694 = vadd.f32 %v628, 3.0
        %v695 = vadd.f32 %v631, 3.0
        %v696 = vadd.f32 %v633, 3.0
        %v697 = vadd.f32 %v636, 3.0
        %v698 = vadd.f32 %v638, 3.0
        %v699 = vadd.f32 %v641, 3.0
        %v700 = vadd.f32 %v643, 3.0
        %v701 = vadd.f32 %v646, 3.0
        %v702 = vadd.f32 %v648, 3.0
        %v703 = vadd.f32 %v651, 3.0
        %v704 = vadd.f32 %v653, 3.0
        %v705 = vadd.f32 %v656, 3.0
        %v706 = vadd.f32 %v658, 3.0
        %v707 = vadd.f32 %v661, 3.0
        %v708 = vadd.f32 %v663, 3.0
        %v709 = vadd.f32 %v666, 3.0
        %v710 = vadd.f32 %v668, 3.0
        %v711 = vadd.f32 %v671, 3.0
        %v712 = vadd.f32 %v673, 3.0
        %v713 = vadd.f32 %v676, 3.0
        %v714 = vadd.f32 %v678, 3.0
        %v715 = vadd.f32 %v681, 3.0
        %v716 = vadd.f32 %v683, 3.0
        %v717 = vmax.f32 %v685, 0.0
        %v718 = vmax.f32 %v686, 0.0
        %v719 = vmax.f32 %v687, 0.0
        %v720 = vmax.f32 %v688, 0.0
        %v721 = vmax.f32 %v689, 0.0
        %v722 = vmax.f32 %v690, 0.0
        %v723 = vmax.f32 %v691, 0.0
        %v724 = vmax.f32 %v692, 0.0
        %v725 = vmax.f32 %v693, 0.0
        %v726 = vmax.f32 %v694, 0.0
        %v727 = vmax.f32 %v695, 0.0
        %v728 = vmax.f32 %v696, 0.0
        %v729 = vmax.f32 %v697, 0.0
        %v730 = vmax.f32 %v698, 0.0
        %v731 = vmax.f32 %v699, 0.0
        %v732 = vmax.f32 %v700, 0.0
        %v733 = vmax.f32 %v701, 0.0
        %v734 = vmax.f32 %v702, 0.0
        %v735 = vmax.f32 %v703, 0.0
        %v736 = vmax.f32 %v704, 0.0
        %v737 = vmax.f32 %v705, 0.0
        %v738 = vmax.f32 %v706, 0.0
        %v739 = vmax.f32 %v707, 0.0
        %v740 = vmax.f32 %v708, 0.0
        %v741 = vmax.f32 %v709, 0.0
        %v742 = vmax.f32 %v710, 0.0
        %v743 = vmax.f32 %v711, 0.0
        %v744 = vmax.f32 %v712, 0.0
        %v745 = vmax.f32 %v713, 0.0
        %v746 = vmax.f32 %v714, 0.0
        %v747 = vmax.f32 %v715, 0.0
        %v748 = vmax.f32 %v716, 0.0
        %v749 = vmin.f32 %v717, 6.0
        %v750 = vmin.f32 %v718, 6.0
        %v751 = vmin.f32 %v719, 6.0
        %v752 = vmin.f32 %v720, 6.0
        %v753 = vmin.f32 %v721, 6.0
        %v754 = vmin.f32 %v722, 6.0
        %v755 = vmin.f32 %v723, 6.0
        %v756 = vmin.f32 %v724, 6.0
        %v757 = vmin.f32 %v725, 6.0
        %v758 = vmin.f32 %v726, 6.0
        %v759 = vmin.f32 %v727, 6.0
        %v760 = vmin.f32 %v728, 6.0
        %v761 = vmin.f32 %v729, 6.0
        %v762 = vmin.f32 %v730, 6.0
        %v763 = vmin.f32 %v731, 6.0
        %v764 = vmin.f32 %v732, 6.0
        %v765 = vmin.f32 %v733, 6.0
        %v766 = vmin.f32 %v734, 6.0
        %v767 = vmin.f32 %v735, 6.0
        %v768 = vmin.f32 %v736, 6.0
        %v769 = vmin.f32 %v737, 6.0
        %v770 = vmin.f32 %v738, 6.0
        %v771 = vmin.f32 %v739, 6.0
        %v772 = vmin.f32 %v740, 6.0
        %v773 = vmin.f32 %v741, 6.0
        %v774 = vmin.f32 %v742, 6.0
        %v775 = vmin.f32 %v743, 6.0
        %v776 = vmin.f32 %v744, 6.0
        %v777 = vmin.f32 %v745, 6.0
        %v778 = vmin.f32 %v746, 6.0
        %v779 = vmin.f32 %v747, 6.0
        %v780 = vmin.f32 %v748, 6.0
        %v781 = vmul.f32 %v606, %v749
        %v782 = vmul.f32 %v608, %v750
        %v783 = vmul.f32 %v611, %v751
        %v784 = vmul.f32 %v613, %v752
        %v785 = vmul.f32 %v616, %v753
        %v786 = vmul.f32 %v618, %v754
        %v787 = vmul.f32 %v621, %v755
        %v788 = vmul.f32 %v623, %v756
        %v789 = vmul.f32 %v626, %v757
        %v790 = vmul.f32 %v628, %v758
        %v791 = vmul.f32 %v631, %v759
        %v792 = vmul.f32 %v633, %v760
        %v793 = vmul.f32 %v636, %v761
        %v794 = vmul.f32 %v638, %v762
        %v795 = vmul.f32 %v641, %v763
        %v796 = vmul.f32 %v643, %v764
        %v797 = vmul.f32 %v646, %v765
        %v798 = vmul.f32 %v648, %v766
        %v799 = vmul.f32 %v651, %v767
        %v800 = vmul.f32 %v653, %v768
        %v801 = vmul.f32 %v656, %v769
        %v802 = vmul.f32 %v658, %v770
        %v803 = vmul.f32 %v661, %v771
        %v804 = vmul.f32 %v663, %v772
        %v805 = vmul.f32 %v666, %v773
        %v806 = vmul.f32 %v668, %v774
        %v807 = vmul.f32 %v671, %v775
        %v808 = vmul.f32 %v673, %v776
        %v809 = vmul.f32 %v676, %v777
        %v810 = vmul.f32 %v678, %v778
        %v811 = vmul.f32 %v681, %v779
        %v812 = vmul.f32 %v683, %v780
        %v813 = vmul.f32 %v781, 0.16666667
        %v814 = vmul.f32 %v782, 0.16666667
        %v815 = vmul.f32 %v783, 0.16666667
        %v816 = vmul.f32 %v784, 0.16666667
        %v817 = vmul.f32 %v785, 0.16666667
        %v818 = vmul.f32 %v786, 0.16666667
        %v819 = vmul.f32 %v787, 0.16666667
        %v820 = vmul.f32 %v788, 0.16666667
        %v821 = vmul.f32 %v789, 0.16666667
        %v822 = vmul.f32 %v790, 0.16666667
        %v823 = vmul.f32 %v791, 0.16666667
        %v824 = vmul.f32 %v792, 0.16666667
        %v825 = vmul.f32 %v793, 0.16666667
        %v826 = vmul.f32 %v794, 0.16666667
        %v827 = vmul.f32 %v795, 0.16666667
        %v828 = vmul.f32 %v796, 0.16666667
        %v829 = vmul.f32 %v797, 0.16666667
        %v830 = vmul.f32 %v798, 0.16666667
        %v831 = vmul.f32 %v799, 0.16666667
        %v832 = vmul.f32 %v800, 0.16666667
        %v833 = vmul.f32 %v801, 0.16666667
        %v834 = vmul.f32 %v802, 0.16666667
        %v835 = vmul.f32 %v803, 0.16666667
        %v836 = vmul.f32 %v804, 0.16666667
        %v837 = vmul.f32 %v805, 0.16666667
        %v838 = vmul.f32 %v806, 0.16666667
        %v839 = vmul.f32 %v807, 0.16666667
        %v840 = vmul.f32 %v808, 0.16666667
        %v841 = vmul.f32 %v809, 0.16666667
        %v842 = vmul.f32 %v810, 0.16666667
        %v843 = vmul.f32 %v811, 0.16666667
        %v844 = vmul.f32 %v812, 0.16666667
        %845 = vst [vmem:[%s337 + $0x1] sm:$0xff] %v813
        %846 = vst [vmem:[%s337 + $0x11] sm:$0xff] %v814
        %847 = vst [vmem:[%s337 + $0x21] sm:$0xff] %v815
        %848 = vst [vmem:[%s337 + $0x31] sm:$0xff] %v816
        %849 = vst [vmem:[%s337 + $0x41] sm:$0xff] %v817
        %850 = vst [vmem:[%s337 + $0x51] sm:$0xff] %v818
        %851 = vst [vmem:[%s337 + $0x61] sm:$0xff] %v819
        %852 = vst [vmem:[%s337 + $0x71] sm:$0xff] %v820
        %853 = vst [vmem:[%s360 + $0x1] sm:$0xff] %v821
        %854 = vst [vmem:[%s360 + $0x11] sm:$0xff] %v822
        %855 = vst [vmem:[%s360 + $0x21] sm:$0xff] %v823
        %856 = vst [vmem:[%s360 + $0x31] sm:$0xff] %v824
        %857 = vst [vmem:[%s360 + $0x41] sm:$0xff] %v825
        %858 = vst [vmem:[%s360 + $0x51] sm:$0xff] %v826
        %859 = vst [vmem:[%s360 + $0x61] sm:$0xff] %v827
        %860 = vst [vmem:[%s360 + $0x71] sm:$0xff] %v828
        %861 = vst [vmem:[%s383 + $0x1] sm:$0xff] %v829
        %862 = vst [vmem:[%s383 + $0x11] sm:$0xff] %v830
        %863 = vst [vmem:[%s383 + $0x21] sm:$0xff] %v831
        %864 = vst [vmem:[%s383 + $0x31] sm:$0xff] %v832
        %865 = vst [vmem:[%s383 + $0x41] sm:$0xff] %v833
        %866 = vst [vmem:[%s383 + $0x51] sm:$0xff] %v834
        %867 = vst [vmem:[%s383 + $0x61] sm:$0xff] %v835
        %868 = vst [vmem:[%s383 + $0x71] sm:$0xff] %v836
        %869 = vst [vmem:[%s406 + $0x1] sm:$0xff] %v837
        %870 = vst [vmem:[%s406 + $0x11] sm:$0xff] %v838
        %871 = vst [vmem:[%s406 + $0x21] sm:$0xff] %v839
        %872 = vst [vmem:[%s406 + $0x31] sm:$0xff] %v840
        %873 = vst [vmem:[%s406 + $0x41] sm:$0xff] %v841
        %874 = vst [vmem:[%s406 + $0x51] sm:$0xff] %v842
        %875 = vst [vmem:[%s406 + $0x61] sm:$0xff] %v843
        %876 = vst [vmem:[%s406 + $0x71] sm:$0xff] %v844
        %v877 = vld [vmem:[#allocation2] sm:$0xff]
        %v878 = vld [vmem:[#allocation2 + $0x10] sm:$0xff]
        %v879 = vld [vmem:[#allocation2 + $0x20] sm:$0xff]
        %v880 = vld [vmem:[#allocation2 + $0x30] sm:$0xff]
        %v881 = vld [vmem:[#allocation2 + $0x40] sm:$0xff]
        %v882 = vld [vmem:[#allocation2 + $0x50] sm:$0xff]
        %v883 = vld [vmem:[#allocation2 + $0x60] sm:$0xff]
        %v884 = vld [vmem:[#allocation2 + $0x70] sm:$0xff]
        %v885 = vld [vmem:[%s3] sm:$0x1]
        %v886 = vperm.slane %v885, 0
        %v887 = vmul.f32 %v877, %v886
        %v888 = vmul.f32 %v878, %v886
        %v889 = vmul.f32 %v879, %v886
        %v890 = vmul.f32 %v880, %v886
        %v891 = vmul.f32 %v881, %v886
        %v892 = vmul.f32 %v882, %v886
        %v893 = vmul.f32 %v883, %v886
        %v894 = vmul.f32 %v884, %v886
        %v895 = vld [vmem:[%s354] sm:$0xff]
        %v896 = vld [vmem:[%s354 + $0x10] sm:$0xff]
        %v897 = vld [vmem:[%s354 + $0x20] sm:$0xff]
        %v898 = vld [vmem:[%s354 + $0x30] sm:$0xff]
        %v899 = vld [vmem:[%s354 + $0x40] sm:$0xff]
        %v900 = vld [vmem:[%s354 + $0x50] sm:$0xff]
        %v901 = vld [vmem:[%s354 + $0x60] sm:$0xff]
        %v902 = vld [vmem:[%s354 + $0x70] sm:$0xff]
        %v903 = vld [vmem:[%s3 + $0x1] sm:$0x1]
        %v904 = vperm.slane %v903, 0
        %v905 = vmul.f32 %v895, %v904
        %v906 = vmul.f32 %v896, %v904
        %v907 = vmul.f32 %v897, %v904
        %v908 = vmul.f32 %v898, %v904
        %v909 = vmul.f32 %v899, %v904
        %v910 = vmul.f32 %v900, %v904
        %v911 = vmul.f32 %v901, %v904
        %v912 = vmul.f32 %v902, %v904
        %v913 = vadd.f32 %v887, %v905
        %v914 = vadd.f32 %v888, %v906
        %v915 = vadd.f32 %v889, %v907
        %v916 = vadd.f32 %v890, %v908
        %v917 = vadd.f32 %v891, %v909
        %v918 = vadd.f32 %v892, %v910
        %v919 = vadd.f32 %v893, %v911
        %v920 = vadd.f32 %v894, %v912
        %v921 = vld [vmem:[#allocation2 + $0x1] sm:$0xff]
        %v922 = vld [vmem:[#allocation2 + $0x11] sm:$0xff]
        %v923 = vld [vmem:[#allocation2 + $0x21] sm:$0xff]
        %v924 = vld [vmem:[#allocation2 + $0x31] sm:$0xff]
        %v925 = vld [vmem:[#allocation2 + $0x41] sm:$0xff]
        %v926 = vld [vmem:[#allocation2 + $0x51] sm:$0xff]
        %v927 = vld [vmem:[#allocation2 + $0x61] sm:$0xff]
        %v928 = vld [vmem:[#allocation2 + $0x71] sm:$0xff]
        %v929 = vld [vmem:[%s3 + $0x2] sm:$0x1]
        %v930 = vperm.slane %v929, 0
        %v931 = vmul.f32 %v921, %v930
        %v932 = vmul.f32 %v922, %v930
        %v933 = vmul.f32 %v923, %v930
        %v934 = vmul.f32 %v924, %v930
        %v935 = vmul.f32 %v925, %v930
        %v936 = vmul.f32 %v926, %v930
        %v937 = vmul.f32 %v927, %v930
        %v938 = vmul.f32 %v928, %v930
        %v939 = vadd.f32 %v913, %v931
        %v940 = vadd.f32 %v914, %v932
        %v941 = vadd.f32 %v915, %v933
        %v942 = vadd.f32 %v916, %v934
        %v943 = vadd.f32 %v917, %v935
        %v944 = vadd.f32 %v918, %v936
        %v945 = vadd.f32 %v919, %v937
        %v946 = vadd.f32 %v920, %v938
        %v947 = vld [vmem:[%s354 + $0x1] sm:$0xff]
        %v948 = vld [vmem:[%s354 + $0x11] sm:$0xff]
        %v949 = vld [vmem:[%s354 + $0x21] sm:$0xff]
        %v950 = vld [vmem:[%s354 + $0x31] sm:$0xff]
        %v951 = vld [vmem:[%s354 + $0x41] sm:$0xff]
        %v952 = vld [vmem:[%s354 + $0x51] sm:$0xff]
        %v953 = vld [vmem:[%s354 + $0x61] sm:$0xff]
        %v954 = vld [vmem:[%s354 + $0x71] sm:$0xff]
        %v955 = vld [vmem:[%s3 + $0x3] sm:$0x1]
        %v956 = vperm.slane %v955, 0
        %v957 = vmul.f32 %v947, %v956
        %v958 = vmul.f32 %v948, %v956
        %v959 = vmul.f32 %v949, %v956
        %v960 = vmul.f32 %v950, %v956
        %v961 = vmul.f32 %v951, %v956
        %v962 = vmul.f32 %v952, %v956
        %v963 = vmul.f32 %v953, %v956
        %v964 = vmul.f32 %v954, %v956
        %v965 = vadd.f32 %v939, %v957
        %v966 = vadd.f32 %v940, %v958
        %v967 = vadd.f32 %v941, %v959
        %v968 = vadd.f32 %v942, %v960
        %v969 = vadd.f32 %v943, %v961
        %v970 = vadd.f32 %v944, %v962
        %v971 = vadd.f32 %v945, %v963
        %v972 = vadd.f32 %v946, %v964
        %v973 = vld [vmem:[#allocation2 + $0x2] sm:$0xff]
        %v974 = vld [vmem:[#allocation2 + $0x12] sm:$0xff]
        %v975 = vld [vmem:[#allocation2 + $0x22] sm:$0xff]
        %v976 = vld [vmem:[#allocation2 + $0x32] sm:$0xff]
        %v977 = vld [vmem:[#allocation2 + $0x42] sm:$0xff]
        %v978 = vld [vmem:[#allocation2 + $0x52] sm:$0xff]
        %v979 = vld [vmem:[#allocation2 + $0x62] sm:$0xff]
        %v980 = vld [vmem:[#allocation2 + $0x72] sm:$0xff]
        %v981 = vld [vmem:[%s3 + $0x4] sm:$0x1]
        %v982 = vperm.slane %v981, 0
        %v983 = vmul.f32 %v973, %v982
        %v984 = vmul.f32 %v974, %v982
        %v985 = vmul.f32 %v975, %v982
        %v986 = vmul.f32 %v976, %v982
        %v987 = vmul.f32 %v977, %v982
        %v988 = vmul.f32 %v978, %v982
        %v989 = vmul.f32 %v979, %v982
        %v990 = vmul.f32 %v980, %v982
        %v991 = vadd.f32 %v965, %v983
        %v992 = vadd.f32 %v966, %v984
        %v993 = vadd.f32 %v967, %v985
        %v994 = vadd.f32 %v968, %v986
        %v995 = vadd.f32 %v969, %v987
        %v996 = vadd.f32 %v970, %v988
        %v997 = vadd.f32 %v971, %v989
        %v998 = vadd.f32 %v972, %v990
        %v999 = vld [vmem:[%s377] sm:$0xff]
        %v1000 = vld [vmem:[%s377 + $0x10] sm:$0xff]
        %v1001 = vld [vmem:[%s377 + $0x20] sm:$0xff]
        %v1002 = vld [vmem:[%s377 + $0x30] sm:$0xff]
        %v1003 = vld [vmem:[%s377 + $0x40] sm:$0xff]
        %v1004 = vld [vmem:[%s377 + $0x50] sm:$0xff]
        %v1005 = vld [vmem:[%s377 + $0x60] sm:$0xff]
        %v1006 = vld [vmem:[%s377 + $0x70] sm:$0xff]
        %v1007 = vld [vmem:[%s3 + $0x5] sm:$0x1]
        %v1008 = vperm.slane %v1007, 0
        %v1009 = vmul.f32 %v999, %v1008
        %v1010 = vmul.f32 %v1000, %v1008
        %v1011 = vmul.f32 %v1001, %v1008
        %v1012 = vmul.f32 %v1002, %v1008
        %v1013 = vmul.f32 %v1003, %v1008
        %v1014 = vmul.f32 %v1004, %v1008
        %v1015 = vmul.f32 %v1005, %v1008
        %v1016 = vmul.f32 %v1006, %v1008
        %v1017 = vadd.f32 %v991, %v1009
        %v1018 = vadd.f32 %v992, %v1010
        %v1019 = vadd.f32 %v993, %v1011
        %v1020 = vadd.f32 %v994, %v1012
        %v1021 = vadd.f32 %v995, %v1013
        %v1022 = vadd.f32 %v996, %v1014
        %v1023 = vadd.f32 %v997, %v1015
        %v1024 = vadd.f32 %v998, %v1016
        %v1025 = vld [vmem:[%s400] sm:$0xff]
        %v1026 = vld [vmem:[%s400 + $0x10] sm:$0xff]
        %v1027 = vld [vmem:[%s400 + $0x20] sm:$0xff]
        %v1028 = vld [vmem:[%s400 + $0x30] sm:$0xff]
        %v1029 = vld [vmem:[%s400 + $0x40] sm:$0xff]
        %v1030 = vld [vmem:[%s400 + $0x50] sm:$0xff]
        %v1031 = vld [vmem:[%s400 + $0x60] sm:$0xff]
        %v1032 = vld [vmem:[%s400 + $0x70] sm:$0xff]
        %v1033 = vld [vmem:[%s3 + $0x6] sm:$0x1]
        %v1034 = vperm.slane %v1033, 0
        %v1035 = vmul.f32 %v1025, %v1034
        %v1036 = vmul.f32 %v1026, %v1034
        %v1037 = vmul.f32 %v1027, %v1034
        %v1038 = vmul.f32 %v1028, %v1034
        %v1039 = vmul.f32 %v1029, %v1034
        %v1040 = vmul.f32 %v1030, %v1034
        %v1041 = vmul.f32 %v1031, %v1034
        %v1042 = vmul.f32 %v1032, %v1034
        %v1043 = vadd.f32 %v1017, %v1035
        %v1044 = vadd.f32 %v1018, %v1036
        %v1045 = vadd.f32 %v1019, %v1037
        %v1046 = vadd.f32 %v1020, %v1038
        %v1047 = vadd.f32 %v1021, %v1039
        %v1048 = vadd.f32 %v1022, %v1040
        %v1049 = vadd.f32 %v1023, %v1041
        %v1050 = vadd.f32 %v1024, %v1042
        %v1051 = vld [vmem:[%s377 + $0x1] sm:$0xff]
        %v1052 = vld [vmem:[%s377 + $0x11] sm:$0xff]
        %v1053 = vld [vmem:[%s377 + $0x21] sm:$0xff]
        %v1054 = vld [vmem:[%s377 + $0x31] sm:$0xff]
        %v1055 = vld [vmem:[%s377 + $0x41] sm:$0xff]
        %v1056 = vld [vmem:[%s377 + $0x51] sm:$0xff]
        %v1057 = vld [vmem:[%s377 + $0x61] sm:$0xff]
        %v1058 = vld [vmem:[%s377 + $0x71] sm:$0xff]
        %v1059 = vld [vmem:[%s3 + $0x7] sm:$0x1]
        %v1060 = vperm.slane %v1059, 0
        %v1061 = vmul.f32 %v1051, %v1060
        %v1062 = vmul.f32 %v1052, %v1060
        %v1063 = vmul.f32 %v1053, %v1060
        %v1064 = vmul.f32 %v1054, %v1060
        %v1065 = vmul.f32 %v1055, %v1060
        %v1066 = vmul.f32 %v1056, %v1060
        %v1067 = vmul.f32 %v1057, %v1060
        %v1068 = vmul.f32 %v1058, %v1060
        %v1069 = vadd.f32 %v1043, %v1061
        %v1070 = vadd.f32 %v1044, %v1062
        %v1071 = vadd.f32 %v1045, %v1063
        %v1072 = vadd.f32 %v1046, %v1064
        %v1073 = vadd.f32 %v1047, %v1065
        %v1074 = vadd.f32 %v1048, %v1066
        %v1075 = vadd.f32 %v1049, %v1067
        %v1076 = vadd.f32 %v1050, %v1068
        %v1077 = vld [vmem:[%s400 + $0x1] sm:$0xff]
        %v1078 = vld [vmem:[%s400 + $0x11] sm:$0xff]
        %v1079 = vld [vmem:[%s400 + $0x21] sm:$0xff]
        %v1080 = vld [vmem:[%s400 + $0x31] sm:$0xff]
        %v1081 = vld [vmem:[%s400 + $0x41] sm:$0xff]
        %v1082 = vld [vmem:[%s400 + $0x51] sm:$0xff]
        %v1083 = vld [vmem:[%s400 + $0x61] sm:$0xff]
        %v1084 = vld [vmem:[%s400 + $0x71] sm:$0xff]
        %v1085 = vld [vmem:[%s3 + $0x8] sm:$0x1]
        %v1086 = vperm.slane %v1085, 0
        %v1087 = vmul.f32 %v1077, %v1086
        %v1088 = vmul.f32 %v1078, %v1086
        %v1089 = vmul.f32 %v1079, %v1086
        %v1090 = vmul.f32 %v1080, %v1086
        %v1091 = vmul.f32 %v1081, %v1086
        %v1092 = vmul.f32 %v1082, %v1086
        %v1093 = vmul.f32 %v1083, %v1086
        %v1094 = vmul.f32 %v1084, %v1086
        %v1095 = vadd.f32 %v1069, %v1087
        %v1096 = vadd.f32 %v1070, %v1088
        %v1097 = vadd.f32 %v1071, %v1089
        %v1098 = vadd.f32 %v1072, %v1090
        %v1099 = vadd.f32 %v1073, %v1091
        %v1100 = vadd.f32 %v1074, %v1092
        %v1101 = vadd.f32 %v1075, %v1093
        %v1102 = vadd.f32 %v1076, %v1094
        %v1103 = vld [vmem:[%s377 + $0x2] sm:$0xff]
        %v1104 = vld [vmem:[%s377 + $0x12] sm:$0xff]
        %v1105 = vld [vmem:[%s377 + $0x22] sm:$0xff]
        %v1106 = vld [vmem:[%s377 + $0x32] sm:$0xff]
        %v1107 = vld [vmem:[%s377 + $0x42] sm:$0xff]
        %v1108 = vld [vmem:[%s377 + $0x52] sm:$0xff]
        %v1109 = vld [vmem:[%s377 + $0x62] sm:$0xff]
        %v1110 = vld [vmem:[%s377 + $0x72] sm:$0xff]
        %v1111 = vld [vmem:[%s3 + $0x9] sm:$0x1]
        %v1112 = vperm.slane %v1111, 0
        %v1113 = vmul.f32 %v1103, %v1112
        %v1114 = vmul.f32 %v1104, %v1112
        %v1115 = vmul.f32 %v1105, %v1112
        %v1116 = vmul.f32 %v1106, %v1112
        %v1117 = vmul.f32 %v1107, %v1112
        %v1118 = vmul.f32 %v1108, %v1112
        %v1119 = vmul.f32 %v1109, %v1112
        %v1120 = vmul.f32 %v1110, %v1112
        %v1121 = vadd.f32 %v1095, %v1113
        %v1122 = vadd.f32 %v1096, %v1114
        %v1123 = vadd.f32 %v1097, %v1115
        %v1124 = vadd.f32 %v1098, %v1116
        %v1125 = vadd.f32 %v1099, %v1117
        %v1126 = vadd.f32 %v1100, %v1118
        %v1127 = vadd.f32 %v1101, %v1119
        %v1128 = vadd.f32 %v1102, %v1120
        %v1129 = vld [vmem:[%s337] sm:$0xff]
        %v1130 = vld [vmem:[%s337 + $0x10] sm:$0xff]
        %v1131 = vld [vmem:[%s337 + $0x20] sm:$0xff]
        %v1132 = vld [vmem:[%s337 + $0x30] sm:$0xff]
        %v1133 = vld [vmem:[%s337 + $0x40] sm:$0xff]
        %v1134 = vld [vmem:[%s337 + $0x50] sm:$0xff]
        %v1135 = vld [vmem:[%s337 + $0x60] sm:$0xff]
        %v1136 = vld [vmem:[%s337 + $0x70] sm:$0xff]
        %v1137 = vld [vmem:[%s3 + $0xa] sm:$0x1]
        %v1138 = vperm.slane %v1137, 0
        %v1139 = vmul.f32 %v1129, %v1138
        %v1140 = vmul.f32 %v1130, %v1138
        %v1141 = vmul.f32 %v1131, %v1138
        %v1142 = vmul.f32 %v1132, %v1138
        %v1143 = vmul.f32 %v1133, %v1138
        %v1144 = vmul.f32 %v1134, %v1138
        %v1145 = vmul.f32 %v1135, %v1138
        %v1146 = vmul.f32 %v1136, %v1138
        %v1147 = vadd.f32 %v1121, %v1139
        %v1148 = vadd.f32 %v1122, %v1140
        %v1149 = vadd.f32 %v1123, %v1141
        %v1150 = vadd.f32 %v1124, %v1142
        %v1151 = vadd.f32 %v1125, %v1143
        %v1152 = vadd.f32 %v1126, %v1144
        %v1153 = vadd.f32 %v1127, %v1145
        %v1154 = vadd.f32 %v1128, %v1146
        %v1155 = vld [vmem:[%s360] sm:$0xff]
        %v1156 = vld [vmem:[%s360 + $0x10] sm:$0xff]
        %v1157 = vld [vmem:[%s360 + $0x20] sm:$0xff]
        %v1158 = vld [vmem:[%s360 + $0x30] sm:$0xff]
        %v1159 = vld [vmem:[%s360 + $0x40] sm:$0xff]
        %v1160 = vld [vmem:[%s360 + $0x50] sm:$0xff]
        %v1161 = vld [vmem:[%s360 + $0x60] sm:$0xff]
        %v1162 = vld [vmem:[%s360 + $0x70] sm:$0xff]
        %v1163 = vld [vmem:[%s3 + $0xb] sm:$0x1]
        %v1164 = vperm.slane %v1163, 0
        %v1165 = vmul.f32 %v1155, %v1164
        %v1166 = vmul.f32 %v1156, %v1164
        %v1167 = vmul.f32 %v1157, %v1164
        %v1168 = vmul.f32 %v1158, %v1164
        %v1169 = vmul.f32 %v1159, %v1164
        %v1170 = vmul.f32 %v1160, %v1164
        %v1171 = vmul.f32 %v1161, %v1164
        %v1172 = vmul.f32 %v1162, %v1164
        %v1173 = vadd.f32 %v1147, %v1165
        %v1174 = vadd.f32 %v1148, %v1166
        %v1175 = vadd.f32 %v1149, %v1167
        %v1176 = vadd.f32 %v1150, %v1168
        %v1177 = vadd.f32 %v1151, %v1169
        %v1178 = vadd.f32 %v1152, %v1170
        %v1179 = vadd.f32 %v1153, %v1171
        %v1180 = vadd.f32 %v1154, %v1172
        %v1181 = vld [vmem:[%s337 + $0x1] sm:$0xff]
        %v1182 = vld [vmem:[%s337 + $0x11] sm:$0xff]
        %v1183 = vld [vmem:[%s337 + $0x21] sm:$0xff]
        %v1184 = vld [vmem:[%s337 + $0x31] sm:$0xff]
        %v1185 = vld [vmem:[%s337 + $0x41] sm:$0xff]
        %v1186 = vld [vmem:[%s337 + $0x51] sm:$0xff]
        %v1187 = vld [vmem:[%s337 + $0x61] sm:$0xff]
        %v1188 = vld [vmem:[%s337 + $0x71] sm:$0xff]
        %v1189 = vld [vmem:[%s3 + $0xc] sm:$0x1]
        %v1190 = vperm.slane %v1189, 0
        %v1191 = vmul.f32 %v1181, %v1190
        %v1192 = vmul.f32 %v1182, %v1190
        %v1193 = vmul.f32 %v1183, %v1190
        %v1194 = vmul.f32 %v1184, %v1190
        %v1195 = vmul.f32 %v1185, %v1190
        %v1196 = vmul.f32 %v1186, %v1190
        %v1197 = vmul.f32 %v1187, %v1190
        %v1198 = vmul.f32 %v1188, %v1190
        %v1199 = vadd.f32 %v1173, %v1191
        %v1200 = vadd.f32 %v1174, %v1192
        %v1201 = vadd.f32 %v1175, %v1193
        %v1202 = vadd.f32 %v1176, %v1194
        %v1203 = vadd.f32 %v1177, %v1195
        %v1204 = vadd.f32 %v1178, %v1196
        %v1205 = vadd.f32 %v1179, %v1197
        %v1206 = vadd.f32 %v1180, %v1198
        %v1207 = vld [vmem:[%s360 + $0x1] sm:$0xff]
        %v1208 = vld [vmem:[%s360 + $0x11] sm:$0xff]
        %v1209 = vld [vmem:[%s360 + $0x21] sm:$0xff]
        %v1210 = vld [vmem:[%s360 + $0x31] sm:$0xff]
        %v1211 = vld [vmem:[%s360 + $0x41] sm:$0xff]
        %v1212 = vld [vmem:[%s360 + $0x51] sm:$0xff]
        %v1213 = vld [vmem:[%s360 + $0x61] sm:$0xff]
        %v1214 = vld [vmem:[%s360 + $0x71] sm:$0xff]
        %v1215 = vld [vmem:[%s3 + $0xd] sm:$0x1]
        %v1216 = vperm.slane %v1215, 0
        %v1217 = vmul.f32 %v1207, %v1216
        %v1218 = vmul.f32 %v1208, %v1216
        %v1219 = vmul.f32 %v1209, %v1216
        %v1220 = vmul.f32 %v1210, %v1216
        %v1221 = vmul.f32 %v1211, %v1216
        %v1222 = vmul.f32 %v1212, %v1216
        %v1223 = vmul.f32 %v1213, %v1216
        %v1224 = vmul.f32 %v1214, %v1216
        %v1225 = vadd.f32 %v1199, %v1217
        %v1226 = vadd.f32 %v1200, %v1218
        %v1227 = vadd.f32 %v1201, %v1219
        %v1228 = vadd.f32 %v1202, %v1220
        %v1229 = vadd.f32 %v1203, %v1221
        %v1230 = vadd.f32 %v1204, %v1222
        %v1231 = vadd.f32 %v1205, %v1223
        %v1232 = vadd.f32 %v1206, %v1224
        %v1233 = vld [vmem:[%s337 + $0x2] sm:$0xff]
        %v1234 = vld [vmem:[%s337 + $0x12] sm:$0xff]
        %v1235 = vld [vmem:[%s337 + $0x22] sm:$0xff]
        %v1236 = vld [vmem:[%s337 + $0x32] sm:$0xff]
        %v1237 = vld [vmem:[%s337 + $0x42] sm:$0xff]
        %v1238 = vld [vmem:[%s337 + $0x52] sm:$0xff]
        %v1239 = vld [vmem:[%s337 + $0x62] sm:$0xff]
        %v1240 = vld [vmem:[%s337 + $0x72] sm:$0xff]
        %v1241 = vld [vmem:[%s3 + $0xe] sm:$0x1]
        %v1242 = vperm.slane %v1241, 0
        %v1243 = vmul.f32 %v1233, %v1242
        %v1244 = vmul.f32 %v1234, %v1242
        %v1245 = vmul.f32 %v1235, %v1242
        %v1246 = vmul.f32 %v1236, %v1242
        %v1247 = vmul.f32 %v1237, %v1242
        %v1248 = vmul.f32 %v1238, %v1242
        %v1249 = vmul.f32 %v1239, %v1242
        %v1250 = vmul.f32 %v1240, %v1242
        %v1251 = vadd.f32 %v1225, %v1243
        %v1252 = vadd.f32 %v1226, %v1244
        %v1253 = vadd.f32 %v1227, %v1245
        %v1254 = vadd.f32 %v1228, %v1246
        %v1255 = vadd.f32 %v1229, %v1247
        %v1256 = vadd.f32 %v1230, %v1248
        %v1257 = vadd.f32 %v1231, %v1249
        %v1258 = vadd.f32 %v1232, %v1250
        %v1259 = vld [vmem:[%s383] sm:$0xff]
        %v1260 = vld [vmem:[%s383 + $0x10] sm:$0xff]
        %v1261 = vld [vmem:[%s383 + $0x20] sm:$0xff]
        %v1262 = vld [vmem:[%s383 + $0x30] sm:$0xff]
        %v1263 = vld [vmem:[%s383 + $0x40] sm:$0xff]
        %v1264 = vld [vmem:[%s383 + $0x50] sm:$0xff]
        %v1265 = vld [vmem:[%s383 + $0x60] sm:$0xff]
        %v1266 = vld [vmem:[%s383 + $0x70] sm:$0xff]
        %v1267 = vld [vmem:[%s3 + $0xf] sm:$0x1]
        %v1268 = vperm.slane %v1267, 0
        %v1269 = vmul.f32 %v1259, %v1268
        %v1270 = vmul.f32 %v1260, %v1268
        %v1271 = vmul.f32 %v1261, %v1268
        %v1272 = vmul.f32 %v1262, %v1268
        %v1273 = vmul.f32 %v1263, %v1268
        %v1274 = vmul.f32 %v1264, %v1268
        %v1275 = vmul.f32 %v1265, %v1268
        %v1276 = vmul.f32 %v1266, %v1268
        %v1277 = vadd.f32 %v1251, %v1269
        %v1278 = vadd.f32 %v1252, %v1270
        %v1279 = vadd.f32 %v1253, %v1271
        %v1280 = vadd.f32 %v1254, %v1272
        %v1281 = vadd.f32 %v1255, %v1273
        %v1282 = vadd.f32 %v1256, %v1274
        %v1283 = vadd.f32 %v1257, %v1275
        %v1284 = vadd.f32 %v1258, %v1276
        %v1285 = vld [vmem:[%s406] sm:$0xff]
        %v1286 = vld [vmem:[%s406 + $0x10] sm:$0xff]
        %v1287 = vld [vmem:[%s406 + $0x20] sm:$0xff]
        %v1288 = vld [vmem:[%s406 + $0x30] sm:$0xff]
        %v1289 = vld [vmem:[%s406 + $0x40] sm:$0xff]
        %v1290 = vld [vmem:[%s406 + $0x50] sm:$0xff]
        %v1291 = vld [vmem:[%s406 + $0x60] sm:$0xff]
        %v1292 = vld [vmem:[%s406 + $0x70] sm:$0xff]
        %v1293 = vld [vmem:[%s3 + $0x10] sm:$0x1]
        %v1294 = vperm.slane %v1293, 0
        %v1295 = vmul.f32 %v1285, %v1294
        %v1296 = vmul.f32 %v1286, %v1294
        %v1297 = vmul.f32 %v1287, %v1294
        %v1298 = vmul.f32 %v1288, %v1294
        %v1299 = vmul.f32 %v1289, %v1294
        %v1300 = vmul.f32 %v1290, %v1294
        %v1301 = vmul.f32 %v1291, %v1294
        %v1302 = vmul.f32 %v1292, %v1294
        %v1303 = vadd.f32 %v1277, %v1295
        %v1304 = vadd.f32 %v1278, %v1296
        %v1305 = vadd.f32 %v1279, %v1297
        %v1306 = vadd.f32 %v1280, %v1298
        %v1307 = vadd.f32 %v1281, %v1299
        %v1308 = vadd.f32 %v1282, %v1300
        %v1309 = vadd.f32 %v1283, %v1301
        %v1310 = vadd.f32 %v1284, %v1302
        %v1311 = vld [vmem:[%s383 + $0x1] sm:$0xff]
        %v1312 = vld [vmem:[%s383 + $0x11] sm:$0xff]
        %v1313 = vld [vmem:[%s383 + $0x21] sm:$0xff]
        %v1314 = vld [vmem:[%s383 + $0x31] sm:$0xff]
        %v1315 = vld [vmem:[%s383 + $0x41] sm:$0xff]
        %v1316 = vld [vmem:[%s383 + $0x51] sm:$0xff]
        %v1317 = vld [vmem:[%s383 + $0x61] sm:$0xff]
        %v1318 = vld [vmem:[%s383 + $0x71] sm:$0xff]
        %v1319 = vld [vmem:[%s3 + $0x11] sm:$0x1]
        %v1320 = vperm.slane %v1319, 0
        %v1321 = vmul.f32 %v1311, %v1320
        %v1322 = vmul.f32 %v1312, %v1320
        %v1323 = vmul.f32 %v1313, %v1320
        %v1324 = vmul.f32 %v1314, %v1320
        %v1325 = vmul.f32 %v1315, %v1320
        %v1326 = vmul.f32 %v1316, %v1320
        %v1327 = vmul.f32 %v1317, %v1320
        %v1328 = vmul.f32 %v1318, %v1320
        %v1329 = vadd.f32 %v1303, %v1321
        %v1330 = vadd.f32 %v1304, %v1322
        %v1331 = vadd.f32 %v1305, %v1323
        %v1332 = vadd.f32 %v1306, %v1324
        %v1333 = vadd.f32 %v1307, %v1325
        %v1334 = vadd.f32 %v1308, %v1326
        %v1335 = vadd.f32 %v1309, %v1327
        %v1336 = vadd.f32 %v1310, %v1328
        %v1337 = vld [vmem:[%s406 + $0x1] sm:$0xff]
        %v1338 = vld [vmem:[%s406 + $0x11] sm:$0xff]
        %v1339 = vld [vmem:[%s406 + $0x21] sm:$0xff]
        %v1340 = vld [vmem:[%s406 + $0x31] sm:$0xff]
        %v1341 = vld [vmem:[%s406 + $0x41] sm:$0xff]
        %v1342 = vld [vmem:[%s406 + $0x51] sm:$0xff]
        %v1343 = vld [vmem:[%s406 + $0x61] sm:$0xff]
        %v1344 = vld [vmem:[%s406 + $0x71] sm:$0xff]
        %v1345 = vld [vmem:[%s3 + $0x12] sm:$0x1]
        %v1346 = vperm.slane %v1345, 0
        %v1347 = vmul.f32 %v1337, %v1346
        %v1348 = vmul.f32 %v1338, %v1346
        %v1349 = vmul.f32 %v1339, %v1346
        %v1350 = vmul.f32 %v1340, %v1346
        %v1351 = vmul.f32 %v1341, %v1346
        %v1352 = vmul.f32 %v1342, %v1346
        %v1353 = vmul.f32 %v1343, %v1346
        %v1354 = vmul.f32 %v1344, %v1346
        %v1355 = vadd.f32 %v1329, %v1347
        %v1356 = vadd.f32 %v1330, %v1348
        %v1357 = vadd.f32 %v1331, %v1349
        %v1358 = vadd.f32 %v1332, %v1350
        %v1359 = vadd.f32 %v1333, %v1351
        %v1360 = vadd.f32 %v1334, %v1352
        %v1361 = vadd.f32 %v1335, %v1353
        %v1362 = vadd.f32 %v1336, %v1354
        %v1363 = vld [vmem:[%s383 + $0x2] sm:$0xff]
        %v1364 = vld [vmem:[%s383 + $0x12] sm:$0xff]
        %v1365 = vld [vmem:[%s383 + $0x22] sm:$0xff]
        %v1366 = vld [vmem:[%s383 + $0x32] sm:$0xff]
        %v1367 = vld [vmem:[%s383 + $0x42] sm:$0xff]
        %v1368 = vld [vmem:[%s383 + $0x52] sm:$0xff]
        %v1369 = vld [vmem:[%s383 + $0x62] sm:$0xff]
        %v1370 = vld [vmem:[%s383 + $0x72] sm:$0xff]
        %v1371 = vld [vmem:[%s3 + $0x13] sm:$0x1]
        %v1372 = vperm.slane %v1371, 0
        %v1373 = vmul.f32 %v1363, %v1372
        %v1374 = vmul.f32 %v1364, %v1372
        %v1375 = vmul.f32 %v1365, %v1372
        %v1376 = vmul.f32 %v1366, %v1372
        %v1377 = vmul.f32 %v1367, %v1372
        %v1378 = vmul.f32 %v1368, %v1372
        %v1379 = vmul.f32 %v1369, %v1372
        %v1380 = vmul.f32 %v1370, %v1372
        %v1381 = vadd.f32 %v1355, %v1373
        %v1382 = vadd.f32 %v1356, %v1374
        %v1383 = vadd.f32 %v1357, %v1375
        %v1384 = vadd.f32 %v1358, %v1376
        %v1385 = vadd.f32 %v1359, %v1377
        %v1386 = vadd.f32 %v1360, %v1378
        %v1387 = vadd.f32 %v1361, %v1379
        %v1388 = vadd.f32 %v1362, %v1380
        %s1389 = scalar_lea.vmem [#allocation2], 32
        %v1390 = vld [vmem:[%s1389] sm:$0xff]
        %v1391 = vld [vmem:[%s1389 + $0x10] sm:$0xff]
        %v1392 = vld [vmem:[%s1389 + $0x20] sm:$0xff]
        %v1393 = vld [vmem:[%s1389 + $0x30] sm:$0xff]
        %v1394 = vld [vmem:[%s1389 + $0x40] sm:$0xff]
        %v1395 = vld [vmem:[%s1389 + $0x50] sm:$0xff]
        %v1396 = vld [vmem:[%s1389 + $0x60] sm:$0xff]
        %v1397 = vld [vmem:[%s1389 + $0x70] sm:$0xff]
        %v1398 = vld [vmem:[%s3 + $0x14] sm:$0x1]
        %v1399 = vperm.slane %v1398, 0
        %v1400 = vmul.f32 %v1390, %v1399
        %v1401 = vmul.f32 %v1391, %v1399
        %v1402 = vmul.f32 %v1392, %v1399
        %v1403 = vmul.f32 %v1393, %v1399
        %v1404 = vmul.f32 %v1394, %v1399
        %v1405 = vmul.f32 %v1395, %v1399
        %v1406 = vmul.f32 %v1396, %v1399
        %v1407 = vmul.f32 %v1397, %v1399
        %v1408 = vadd.f32 %v1381, %v1400
        %v1409 = vadd.f32 %v1382, %v1401
        %v1410 = vadd.f32 %v1383, %v1402
        %v1411 = vadd.f32 %v1384, %v1403
        %v1412 = vadd.f32 %v1385, %v1404
        %v1413 = vadd.f32 %v1386, %v1405
        %v1414 = vadd.f32 %v1387, %v1406
        %v1415 = vadd.f32 %v1388, %v1407
        %s1416 = scalar_lea.vmem [#allocation2], 192
        %v1417 = vld [vmem:[%s1416] sm:$0xff]
        %v1418 = vld [vmem:[%s1416 + $0x10] sm:$0xff]
        %v1419 = vld [vmem:[%s1416 + $0x20] sm:$0xff]
        %v1420 = vld [vmem:[%s1416 + $0x30] sm:$0xff]
        %v1421 = vld [vmem:[%s1416 + $0x40] sm:$0xff]
        %v1422 = vld [vmem:[%s1416 + $0x50] sm:$0xff]
        %v1423 = vld [vmem:[%s1416 + $0x60] sm:$0xff]
        %v1424 = vld [vmem:[%s1416 + $0x70] sm:$0xff]
        %v1425 = vld [vmem:[%s3 + $0x15] sm:$0x1]
        %v1426 = vperm.slane %v1425, 0
        %v1427 = vmul.f32 %v1417, %v1426
        %v1428 = vmul.f32 %v1418, %v1426
        %v1429 = vmul.f32 %v1419, %v1426
        %v1430 = vmul.f32 %v1420, %v1426
        %v1431 = vmul.f32 %v1421, %v1426
        %v1432 = vmul.f32 %v1422, %v1426
        %v1433 = vmul.f32 %v1423, %v1426
        %v1434 = vmul.f32 %v1424, %v1426
        %v1435 = vadd.f32 %v1408, %v1427
        %v1436 = vadd.f32 %v1409, %v1428
        %v1437 = vadd.f32 %v1410, %v1429
        %v1438 = vadd.f32 %v1411, %v1430
        %v1439 = vadd.f32 %v1412, %v1431
        %v1440 = vadd.f32 %v1413, %v1432
        %v1441 = vadd.f32 %v1414, %v1433
        %v1442 = vadd.f32 %v1415, %v1434
        %v1443 = vld [vmem:[%s1389 + $0x1] sm:$0xff]
        %v1444 = vld [vmem:[%s1389 + $0x11] sm:$0xff]
        %v1445 = vld [vmem:[%s1389 + $0x21] sm:$0xff]
        %v1446 = vld [vmem:[%s1389 + $0x31] sm:$0xff]
        %v1447 = vld [vmem:[%s1389 + $0x41] sm:$0xff]
        %v1448 = vld [vmem:[%s1389 + $0x51] sm:$0xff]
        %v1449 = vld [vmem:[%s1389 + $0x61] sm:$0xff]
        %v1450 = vld [vmem:[%s1389 + $0x71] sm:$0xff]
        %v1451 = vld [vmem:[%s3 + $0x16] sm:$0x1]
        %v1452 = vperm.slane %v1451, 0
        %v1453 = vmul.f32 %v1443, %v1452
        %v1454 = vmul.f32 %v1444, %v1452
        %v1455 = vmul.f32 %v1445, %v1452
        %v1456 = vmul.f32 %v1446, %v1452
        %v1457 = vmul.f32 %v1447, %v1452
        %v1458 = vmul.f32 %v1448, %v1452
        %v1459 = vmul.f32 %v1449, %v1452
        %v1460 = vmul.f32 %v1450, %v1452
        %v1461 = vadd.f32 %v1435, %v1453
        %v1462 = vadd.f32 %v1436, %v1454
        %v1463 = vadd.f32 %v1437, %v1455
        %v1464 = vadd.f32 %v1438, %v1456
        %v1465 = vadd.f32 %v1439, %v1457
        %v1466 = vadd.f32 %v1440, %v1458
        %v1467 = vadd.f32 %v1441, %v1459
        %v1468 = vadd.f32 %v1442, %v1460
        %v1469 = vld [vmem:[%s1416 + $0x1] sm:$0xff]
        %v1470 = vld [vmem:[%s1416 + $0x11] sm:$0xff]
        %v1471 = vld [vmem:[%s1416 + $0x21] sm:$0xff]
        %v1472 = vld [vmem:[%s1416 + $0x31] sm:$0xff]
        %v1473 = vld [vmem:[%s1416 + $0x41] sm:$0xff]
        %v1474 = vld [vmem:[%s1416 + $0x51] sm:$0xff]
        %v1475 = vld [vmem:[%s1416 + $0x61] sm:$0xff]
        %v1476 = vld [vmem:[%s1416 + $0x71] sm:$0xff]
        %v1477 = vld [vmem:[%s3 + $0x17] sm:$0x1]
        %v1478 = vperm.slane %v1477, 0
        %v1479 = vmul.f32 %v1469, %v1478
        %v1480 = vmul.f32 %v1470, %v1478
        %v1481 = vmul.f32 %v1471, %v1478
        %v1482 = vmul.f32 %v1472, %v1478
        %v1483 = vmul.f32 %v1473, %v1478
        %v1484 = vmul.f32 %v1474, %v1478
        %v1485 = vmul.f32 %v1475, %v1478
        %v1486 = vmul.f32 %v1476, %v1478
        %v1487 = vadd.f32 %v1461, %v1479
        %v1488 = vadd.f32 %v1462, %v1480
        %v1489 = vadd.f32 %v1463, %v1481
        %v1490 = vadd.f32 %v1464, %v1482
        %v1491 = vadd.f32 %v1465, %v1483
        %v1492 = vadd.f32 %v1466, %v1484
        %v1493 = vadd.f32 %v1467, %v1485
        %v1494 = vadd.f32 %v1468, %v1486
        %v1495 = vld [vmem:[%s1389 + $0x2] sm:$0xff]
        %v1496 = vld [vmem:[%s1389 + $0x12] sm:$0xff]
        %v1497 = vld [vmem:[%s1389 + $0x22] sm:$0xff]
        %v1498 = vld [vmem:[%s1389 + $0x32] sm:$0xff]
        %v1499 = vld [vmem:[%s1389 + $0x42] sm:$0xff]
        %v1500 = vld [vmem:[%s1389 + $0x52] sm:$0xff]
        %v1501 = vld [vmem:[%s1389 + $0x62] sm:$0xff]
        %v1502 = vld [vmem:[%s1389 + $0x72] sm:$0xff]
        %v1503 = vld [vmem:[%s3 + $0x18] sm:$0x1]
        %v1504 = vperm.slane %v1503, 0
        %v1505 = vmul.f32 %v1495, %v1504
        %v1506 = vmul.f32 %v1496, %v1504
        %v1507 = vmul.f32 %v1497, %v1504
        %v1508 = vmul.f32 %v1498, %v1504
        %v1509 = vmul.f32 %v1499, %v1504
        %v1510 = vmul.f32 %v1500, %v1504
        %v1511 = vmul.f32 %v1501, %v1504
        %v1512 = vmul.f32 %v1502, %v1504
        %v1513 = vadd.f32 %v1487, %v1505
        %v1514 = vadd.f32 %v1488, %v1506
        %v1515 = vadd.f32 %v1489, %v1507
        %v1516 = vadd.f32 %v1490, %v1508
        %v1517 = vadd.f32 %v1491, %v1509
        %v1518 = vadd.f32 %v1492, %v1510
        %v1519 = vadd.f32 %v1493, %v1511
        %v1520 = vadd.f32 %v1494, %v1512
        %v1521 = vld [vmem:[%s4] sm:$0x1]
        %v1523 = vperm.slane %v1521, 0
        %v1525 = vadd.f32 %v1513, %v1523
        %v1526 = vadd.f32 %v1514, %v1523
        %v1527 = vadd.f32 %v1515, %v1523
        %v1528 = vadd.f32 %v1516, %v1523
        %v1529 = vadd.f32 %v1517, %v1523
        %v1530 = vadd.f32 %v1518, %v1523
        %v1531 = vadd.f32 %v1519, %v1523
        %v1532 = vadd.f32 %v1520, %v1523
        %1533 = vst [vmem:[#allocation3] sm:$0xff] %v1525
        %1534 = vst [vmem:[#allocation3 + $0x8] sm:$0xff] %v1526
        %1535 = vst [vmem:[#allocation3 + $0x10] sm:$0xff] %v1527
        %1536 = vst [vmem:[#allocation3 + $0x18] sm:$0xff] %v1528
        %1537 = vst [vmem:[#allocation3 + $0x20] sm:$0xff] %v1529
        %1538 = vst [vmem:[#allocation3 + $0x28] sm:$0xff] %v1530
        %1539 = vst [vmem:[#allocation3 + $0x30] sm:$0xff] %v1531
        %1540 = vst [vmem:[#allocation3 + $0x38] sm:$0xff] %v1532
        %v1541 = vld [vmem:[#allocation3] sm:$0xff]
        %v1542 = vld [vmem:[#allocation3 + $0x8] sm:$0xff]
        %v1543 = vld [vmem:[#allocation3 + $0x10] sm:$0xff]
        %v1544 = vld [vmem:[#allocation3 + $0x18] sm:$0xff]
        %v1545 = vld [vmem:[#allocation3 + $0x20] sm:$0xff]
        %v1546 = vld [vmem:[#allocation3 + $0x28] sm:$0xff]
        %v1547 = vld [vmem:[#allocation3 + $0x30] sm:$0xff]
        %v1548 = vld [vmem:[#allocation3 + $0x38] sm:$0xff]
        %v1549 = vadd.f32 %v1541, %v1542
        %v1550 = vadd.f32 %v1549, %v1543
        %v1551 = vadd.f32 %v1550, %v1544
        %v1552 = vadd.f32 %v1551, %v1545
        %v1553 = vadd.f32 %v1552, %v1546
        %v1554 = vadd.f32 %v1553, %v1547
        %v1555 = vadd.f32 %v1554, %v1548
        %v1556 = vrot.slane %v1555, 4
        %v1557 = vadd.f32 %v1555, %v1556
        %v1558 = vrot.slane %v1557, 2
        %v1559 = vadd.f32 %v1557, %v1558
        %v1560 = vrot.slane %v1559, 1
        %v1561 = vadd.f32 %v1559, %v1560
        %v1562 = vmul.f32 %v1561, 0.015625
        %v1563 = vld [vmem:[%s5] sm:$0xff]
        %v1564 = vld [vmem:[%s5 + $0x8] sm:$0xff]
        %v1565 = vld [vmem:[%s5 + $0x10] sm:$0xff]
        %v1566 = vld [vmem:[%s5 + $0x18] sm:$0xff]
        %v1567 = vld [vmem:[%s5 + $0x20] sm:$0xff]
        %v1568 = vld [vmem:[%s5 + $0x28] sm:$0xff]
        %v1569 = vld [vmem:[%s5 + $0x30] sm:$0xff]
        %v1570 = vld [vmem:[%s5 + $0x38] sm:$0xff]
        %v1571 = vld [vmem:[%s5 + $0x40] sm:$0xff]
        %v1572 = vld [vmem:[%s5 + $0x48] sm:$0xff]
        %v1573 = vld [vmem:[%s5 + $0x50] sm:$0xff]
        %v1574 = vld [vmem:[%s5 + $0x58] sm:$0xff]
        %v1575 = vld [vmem:[%s5 + $0x60] sm:$0xff]
        %v1576 = vld [vmem:[%s5 + $0x68] sm:$0xff]
        %v1577 = vld [vmem:[%s5 + $0x70] sm:$0xff]
        %v1578 = vld [vmem:[%s5 + $0x78] sm:$0xff]
        %1579 = vmatpush.msra.mxu0 %v1578
        %1580 = vmatpush.msra.mxu0 %v1577
        %1581 = vmatpush.msra.mxu0 %v1576
        %1582 = vmatpush.msra.mxu0 %v1575
        %1583 = vmatpush.msra.mxu0 %v1574
        %1584 = vmatpush.msra.mxu0 %v1573
        %1585 = vmatpush.msra.mxu0 %v1572
        %1586 = vmatpush.msra.mxu0 %v1571
        %1587 = vmatpush.msra.mxu0 %v1570
        %1588 = vmatpush.msra.mxu0 %v1569
        %1589 = vmatpush.msra.mxu0 %v1568
        %1590 = vmatpush.msra.mxu0 %v1567
        %1591 = vmatpush.msra.mxu0 %v1566
        %1592 = vmatpush.msra.mxu0 %v1565
        %1593 = vmatpush.msra.mxu0 %v1564
        %1594 = vmatpush.msra.mxu0 %v1563
        %1595 = vmatmul.f32.gmra.mxu0 %v1562
        %v1596 = vpop.f32.mrf.mxu0
        %v1597 = vadd.f32 0.0, %v1596
        %1598 = vdwg.mxu0
        %v1599 = vmax.f32 %v1597, 0.0
        %v1600 = vld [vmem:[%s6] sm:$0xff]
        %v1601 = vld [vmem:[%s6 + $0x8] sm:$0xff]
        %v1602 = vld [vmem:[%s6 + $0x10] sm:$0xff]
        %v1603 = vld [vmem:[%s6 + $0x18] sm:$0xff]
        %v1604 = vld [vmem:[%s6 + $0x20] sm:$0xff]
        %v1605 = vld [vmem:[%s6 + $0x28] sm:$0xff]
        %v1606 = vld [vmem:[%s6 + $0x30] sm:$0xff]
        %v1607 = vld [vmem:[%s6 + $0x38] sm:$0xff]
        %v1608 = vld [vmem:[%s6 + $0x40] sm:$0xff]
        %v1609 = vld [vmem:[%s6 + $0x48] sm:$0xff]
        %v1610 = vld [vmem:[%s6 + $0x50] sm:$0xff]
        %v1611 = vld [vmem:[%s6 + $0x58] sm:$0xff]
        %v1612 = vld [vmem:[%s6 + $0x60] sm:$0xff]
        %v1613 = vld [vmem:[%s6 + $0x68] sm:$0xff]
        %v1614 = vld [vmem:[%s6 + $0x70] sm:$0xff]
        %v1615 = vld [vmem:[%s6 + $0x78] sm:$0xff]
        %1616 = vmatpush.msra.mxu0 %v1615
        %1617 = vmatpush.msra.mxu0 %v1614
        %1618 = vmatpush.msra.mxu0 %v1613
        %1619 = vmatpush.msra.mxu0 %v1612
        %1620 = vmatpush.msra.mxu0 %v1611
        %1621 = vmatpush.msra.mxu0 %v1610
        %1622 = vmatpush.msra.mxu0 %v1609
        %1623 = vmatpush.msra.mxu0 %v1608
        %1624 = vmatpush.msra.mxu0 %v1607
        %1625 = vmatpush.msra.mxu0 %v1606
        %1626 = vmatpush.msra.mxu0 %v1605
        %1627 = vmatpush.msra.mxu0 %v1604
        %1628 = vmatpush.msra.mxu0 %v1603
        %1629 = vmatpush.msra.mxu0 %v1602
        %1630 = vmatpush.msra.mxu0 %v1601
        %1631 = vmatpush.msra.mxu0 %v1600
        %1632 = vmatmul.f32.gmra.mxu0 %v1599
        %v1633 = vpop.f32.mrf.mxu0
        %v1634 = vadd.f32 3.0, %v1633
        %1635 = vdwg.mxu0
        %v1636 = vmax.f32 %v1634, 0.0
        %v1637 = vmin.f32 %v1636, 6.0
        %v1638 = vmul.f32 %v1637, 0.16666667
        %v1639 = vperm.slane %v1638, 0
        %v1640 = vmul.f32 %v1541, %v1639
        %v1641 = vmul.f32 %v1542, %v1639
        %v1642 = vmul.f32 %v1543, %v1639
        %v1643 = vmul.f32 %v1544, %v1639
        %v1644 = vmul.f32 %v1545, %v1639
        %v1645 = vmul.f32 %v1546, %v1639
        %v1646 = vmul.f32 %v1547, %v1639
        %v1647 = vmul.f32 %v1548, %v1639
        %v1648 = vadd.f32 %v1640, 3.0
        %v1649 = vadd.f32 %v1641, 3.0
        %v1650 = vadd.f32 %v1642, 3.0
        %v1651 = vadd.f32 %v1643, 3.0
        %v1652 = vadd.f32 %v1644, 3.0
        %v1653 = vadd.f32 %v1645, 3.0
        %v1654 = vadd.f32 %v1646, 3.0
        %v1655 = vadd.f32 %v1647, 3.0
        %v1656 = vmax.f32 %v1648, 0.0
        %v1657 = vmax.f32 %v1649, 0.0
        %v1658 = vmax.f32 %v1650, 0.0
        %v1659 = vmax.f32 %v1651, 0.0
        %v1660 = vmax.f32 %v1652, 0.0
        %v1661 = vmax.f32 %v1653, 0.0
        %v1662 = vmax.f32 %v1654, 0.0
        %v1663 = vmax.f32 %v1655, 0.0
        %v1664 = vmin.f32 %v1656, 6.0
        %v1665 = vmin.f32 %v1657, 6.0
        %v1666 = vmin.f32 %v1658, 6.0
        %v1667 = vmin.f32 %v1659, 6.0
        %v1668 = vmin.f32 %v1660, 6.0
        %v1669 = vmin.f32 %v1661, 6.0
        %v1670 = vmin.f32 %v1662, 6.0
        %v1671 = vmin.f32 %v1663, 6.0
        %v1672 = vmul.f32 %v1640, %v1664
        %v1673 = vmul.f32 %v1641, %v1665
        %v1674 = vmul.f32 %v1642, %v1666
        %v1675 = vmul.f32 %v1643, %v1667
        %v1676 = vmul.f32 %v1644, %v1668
        %v1677 = vmul.f32 %v1645, %v1669
        %v1678 = vmul.f32 %v1646, %v1670
        %v1679 = vmul.f32 %v1647, %v1671
        %v1680 = vmul.f32 %v1672, 0.16666667
        %v1681 = vmul.f32 %v1673, 0.16666667
        %v1682 = vmul.f32 %v1674, 0.16666667
        %v1683 = vmul.f32 %v1675, 0.16666667
        %v1684 = vmul.f32 %v1676, 0.16666667
        %v1685 = vmul.f32 %v1677, 0.16666667
        %v1686 = vmul.f32 %v1678, 0.16666667
        %v1687 = vmul.f32 %v1679, 0.16666667
        %v1688 = vpack.c.bf16 %v1681, %v1680
        %v1689 = vpack.c.bf16 %v1683, %v1682
        %v1690 = vpack.c.bf16 %v1685, %v1684
        %v1691 = vpack.c.bf16 %v1687, %v1686
        %v1692 = vld [vmem:[%s7] sm:$0xf]
        %v1693 = vld [vmem:[%s7 + $0x4] sm:$0xf]
        %v1694 = vld [vmem:[%s7 + $0x8] sm:$0xf]
        %v1695 = vld [vmem:[%s7 + $0xc] sm:$0xf]
        %v1696 = vld [vmem:[%s7 + $0x10] sm:$0xf]
        %v1697 = vld [vmem:[%s7 + $0x14] sm:$0xf]
        %v1698 = vld [vmem:[%s7 + $0x18] sm:$0xf]
        %v1699 = vld [vmem:[%s7 + $0x1c] sm:$0xf]
        %v1700 = vld [vmem:[%s7 + $0x20] sm:$0xf]
        %v1701 = vld [vmem:[%s7 + $0x24] sm:$0xf]
        %v1702 = vld [vmem:[%s7 + $0x28] sm:$0xf]
        %v1703 = vld [vmem:[%s7 + $0x2c] sm:$0xf]
        %v1704 = vld [vmem:[%s7 + $0x30] sm:$0xf]
        %v1705 = vld [vmem:[%s7 + $0x34] sm:$0xf]
        %v1706 = vld [vmem:[%s7 + $0x38] sm:$0xf]
        %v1707 = vld [vmem:[%s7 + $0x3c] sm:$0xf]
        %v1708 = vld [vmem:[%s8] sm:$0x1]
        %v1710 = vperm.slane %v1708, 0
        %v1728 = vunpack.c.l.b16 %v1692
        %v1729 = vunpack.c.l.b16 %v1693
        %v1730 = vunpack.c.l.b16 %v1694
        %v1731 = vunpack.c.l.b16 %v1695
        %v1732 = vunpack.c.l.b16 %v1696
        %v1733 = vunpack.c.l.b16 %v1697
        %v1734 = vunpack.c.l.b16 %v1698
        %v1735 = vunpack.c.l.b16 %v1699
        %v1736 = vunpack.c.l.b16 %v1700
        %v1737 = vunpack.c.l.b16 %v1701
        %v1738 = vunpack.c.l.b16 %v1702
        %v1739 = vunpack.c.l.b16 %v1703
        %v1740 = vunpack.c.l.b16 %v1704
        %v1741 = vunpack.c.l.b16 %v1705
        %v1742 = vunpack.c.l.b16 %v1706
        %v1743 = vunpack.c.l.b16 %v1707
        %v1744 = vpack.c.b16 %v1729, %v1728
        %v1745 = vpack.c.b16 %v1731, %v1730
        %v1746 = vpack.c.b16 %v1733, %v1732
        %v1747 = vpack.c.b16 %v1735, %v1734
        %v1748 = vpack.c.b16 %v1737, %v1736
        %v1749 = vpack.c.b16 %v1739, %v1738
        %v1750 = vpack.c.b16 %v1741, %v1740
        %v1751 = vpack.c.b16 %v1743, %v1742
        %1760 = vmatpush.bf16.msra.mxu0 %v1751
        %1761 = vmatpush.bf16.msra.mxu0 %v1750
        %1762 = vmatpush.bf16.msra.mxu0 %v1749
        %1763 = vmatpush.bf16.msra.mxu0 %v1748
        %1764 = vmatpush.bf16.msra.mxu0 %v1747
        %1765 = vmatpush.bf16.msra.mxu0 %v1746
        %1766 = vmatpush.bf16.msra.mxu0 %v1745
        %1767 = vmatpush.bf16.msra.mxu0 %v1744
        %1768 = vmatmul.bf16.gmra.mxu0 %v1688
        %v1769 = vpop.f32.mrf.mxu0
        %v1770 = vadd.f32 %v1710, %v1769
        %v1771 = vpop.f32.mrf.mxu0
        %v1772 = vadd.f32 %v1710, %v1771
        %1773 = vmatmul.bf16.gmra.mxu0 %v1689
        %v1774 = vpop.f32.mrf.mxu0
        %v1775 = vadd.f32 %v1710, %v1774
        %v1776 = vpop.f32.mrf.mxu0
        %v1777 = vadd.f32 %v1710, %v1776
        %1778 = vmatmul.bf16.gmra.mxu0 %v1690
        %v1779 = vpop.f32.mrf.mxu0
        %v1780 = vadd.f32 %v1710, %v1779
        %v1781 = vpop.f32.mrf.mxu0
        %v1782 = vadd.f32 %v1710, %v1781
        %1783 = vmatmul.bf16.gmra.mxu0 %v1691
        %v1784 = vpop.f32.mrf.mxu0
        %v1785 = vadd.f32 %v1710, %v1784
        %v1786 = vpop.f32.mrf.mxu0
        %v1787 = vadd.f32 %v1710, %v1786
        %1788 = vdwg.mxu0
        %vm1789 = vcmask 326656
        %1790 = vst.msk [vmem:[%s325] sm:$0xff] %vm1789, %v1770
        %1791 = vst.msk [vmem:[%s325 + $0x8] sm:$0xff] %vm1789, %v1772
        %1792 = vst.msk [vmem:[%s325 + $0x10] sm:$0xff] %vm1789, %v1775
        %1793 = vst.msk [vmem:[%s325 + $0x18] sm:$0xff] %vm1789, %v1777
        %1794 = vst.msk [vmem:[%s325 + $0x20] sm:$0xff] %vm1789, %v1780
        %1795 = vst.msk [vmem:[%s325 + $0x28] sm:$0xff] %vm1789, %v1782
        %1796 = vst.msk [vmem:[%s325 + $0x30] sm:$0xff] %vm1789, %v1785
        %1797 = vst.msk [vmem:[%s325 + $0x38] sm:$0xff] %vm1789, %v1787
        %s1798 = sand.u32 %s225, 1
        %s1799 = scalar_lea.sflag [#allocation5], %s1798
        %s1800 = sand.u32 %s225, 1
        %s1801 = smul.addr %s1800, 64
        %s1802 = scalar_lea.vmem [#allocation4], %s1801
        // Predicated region
        $region57: #{mobile_bottleneck_forward.1} parent=55 // pred_check
          %p1803 = pneg %p235
        $region58: #{mobile_bottleneck_forward.1} parent=55 // pred_check_branch
          %1805 = sbr.rel (%p1803) target = $region60
        $region59: #{mobile_bottleneck_forward.1} parent=55 // pred_region
          %1807 = vsyncadd %s1799, 0
          %s1808 = smul.addr %s23, 8
          %s1809 = smul.addr %s1808, 8
          %s1810 = scalar_lea.hbm %s9, %s1809
          %s1811 = sshll.u32 %s1802, 4
          %s1812 = int_to_ptr.vmem [resolvable:$true] %s1811
          %s1813 = sshll.u32 %s1810, 4
          %s1814 = int_to_ptr.hbm [resolvable:$true] %s1813
          %1819 = dma.vmem_to_hbm [thread:$0]  %s1812, 1024, %s1814, %s1799, 128, 128, 8
        $region60: #{mobile_bottleneck_forward.1} parent=55 // pred_fallthru
          _
      $region56: #{mobile_bottleneck_forward.1} parent=5 // pred_fallthru
        _
      %p1820 = scmp.le.s32.totalorder 2, %s18
      // Predicated region
      $region61: #{mobile_bottleneck_forward.1} parent=5 // pred_check
        %p1821 = pneg %p1820
      $region62: #{mobile_bottleneck_forward.1} parent=5 // pred_check_branch
        %1823 = sbr.rel (%p1821) target = $region64
      $region63: #{mobile_bottleneck_forward.1} parent=5 // pred_region
        %s1824 = ssub.s32 %s18, 2
        // Predicated region
        $region65: #{mobile_bottleneck_forward.1} parent=63 // pred_check
          %p1825 = pneg %p241
        $region66: #{mobile_bottleneck_forward.1} parent=63 // pred_check_branch
          %1827 = sbr.rel (%p1825) target = $region68
        $region67: #{mobile_bottleneck_forward.1} parent=63 // pred_region
          %s1828 = sand.u32 %s226, 1
          %s1829 = scalar_lea.sflag [#allocation5], %s1828
          %s1830 = sand.u32 %s226, 1
          %s1831 = smul.addr %s1830, 64
          %s1832 = scalar_lea.vmem [#allocation4], %s1831
          %1834 = dma.done %s1829, 1024
        $region68: #{mobile_bottleneck_forward.1} parent=63 // pred_fallthru
          _
      $region64: #{mobile_bottleneck_forward.1} parent=5 // pred_fallthru
        _
    $region6: #{mobile_bottleneck_forward.1} parent=1 // loop_footer
      %s22 = sadd.s32 1, %s18
    $region7: #{mobile_bottleneck_forward.1} parent=1 // loop_footer_branch
      %17 = sbr.rel target = $region3
    $region8: #{mobile_bottleneck_forward.1} parent=1 // loop_exit
      _
    %1835 = vsyncpa [#allocation5], 1
    %s1836 = scalar_lea.sflag [#allocation5], 1
    %1837 = vsyncpa %s1836, 1

</llo_original>
